<compile_context>
chip_gen: v7x
topology: tpu7x:2x2x1
jax: 0.10.0
libtpu: 0.0.40
codegen_flags: <defaults>
</compile_context>

<pallas_src>
import functools
import math

import jax
import jax.numpy as jnp
from jax.experimental import pallas as pl
from jax.experimental.pallas import tpu as pltpu

LRELU_SLOPE = 0.2
BN_EPS = 1e-5


def _leaky(x):
    # LeakyReLU(0.2): max(x, 0.2*x) is identical for slope < 1 and cheaper.
    return jnp.maximum(x, LRELU_SLOPE * x)


def _full_spec(shape):
    n = len(shape)
    return pl.BlockSpec(tuple(shape), lambda i, _n=n: (0,) * _n)


def _call(kernel, out_dims, out_dtype, *args, flops=0):
    """Single-invocation pallas_call with whole-array blocks for every operand."""
    out_dims = tuple(int(d) for d in out_dims)
    in_specs = [_full_spec(tuple(a.shape)) for a in args]
    in_bytes = sum(math.prod(a.shape) * jnp.dtype(a.dtype).itemsize for a in args)
    out_bytes = math.prod(out_dims) * jnp.dtype(out_dtype).itemsize
    total_bytes = int(in_bytes + out_bytes)
    # Explicit scoped-VMEM limit: portable across v5e (16 MiB default), v6e
    # (32 MiB default) and v7x (64 MiB physical); always >= what we need here.
    vmem_limit = int(min(64 << 20, max(16 << 20, 2 * total_bytes + (4 << 20))))
    return pl.pallas_call(
        kernel,
        grid=(1,),
        in_specs=in_specs,
        out_specs=_full_spec(out_dims),
        out_shape=jax.ShapeDtypeStruct(out_dims, out_dtype),
        compiler_params=pltpu.CompilerParams(
            dimension_semantics=("arbitrary",),
            vmem_limit_bytes=vmem_limit,
        ),
        cost_estimate=pl.CostEstimate(
            flops=int(flops), transcendentals=0, bytes_accessed=total_bytes),
    )(*args)


# ----------------------------- Pallas kernels ------------------------------ #

def conv_block_kernel(p_ref, w_ref, b_ref, g_ref, beta_ref, o_ref):
    """im2col-matmul conv (bf16 operands, f32 acc) + bias -> LeakyReLU(0.2)
    -> BatchNorm2d with training-mode batch statistics (single-pass sum/sumsq)."""
    x = jnp.dot(p_ref[...], w_ref[...], preferred_element_type=jnp.float32)
    x = x + b_ref[...]
    x = _leaky(x)
    m = x.shape[0]                                   # rows == N*H_out*W_out
    s1 = jnp.sum(x, axis=0, keepdims=True)           # (1, C)
    s2 = jnp.sum(x * x, axis=0, keepdims=True)       # (1, C)
    mean = s1 * (1.0 / m)
    var = jnp.maximum(s2 * (1.0 / m) - mean * mean, 0.0)   # biased + clamp >= 0
    scale = g_ref[...] * jax.lax.rsqrt(var + BN_EPS)
    shift = beta_ref[...] - mean * scale
    o_ref[...] = (x * scale + shift).astype(o_ref.dtype)   # bf16 activations out


def tail_kernel(net_ref, wza_ref, bza_ref, eps_ref,
                w1_ref, b1_ref, w2_ref, b2_ref, w3_ref, b3_ref,
                s_ref, st_ref, out_ref, *, eb, nz):
    """Fused post-conv tail:
       - z0/a projectors as ONE matmul against the concatenated (flat, 2*n_z) weight
       - v_network: 3 x (Linear + LeakyReLU) on flattened (eps_basis*B, eps_dim)
       - combine: z = z0 + sum(v); Ez = z0 + a*mean(v); Varz = a*a*var(v) (unbiased)
       Output is a single (3, B, n_z) slab: [z, Ez, Varz]."""
    # Fused projectors.
    proj = jnp.dot(net_ref[...], wza_ref[...], preferred_element_type=jnp.float32)
    proj = _leaky(proj + bza_ref[...])
    z0 = proj[:, :nz]
    a = proj[:, nz:]

    # v_network on the flattened (eps_basis*B, eps_dim) noise matrix.
    h = jnp.dot(eps_ref[...], w1_ref[...], preferred_element_type=jnp.float32)
    h = _leaky(h + b1_ref[...])
    h = jnp.dot(h.astype(jnp.bfloat16), w2_ref[...], preferred_element_type=jnp.float32)
    h = _leaky(h + b2_ref[...])
    v = jnp.dot(h.astype(jnp.bfloat16), w3_ref[...], preferred_element_type=jnp.float32)
    v = _leaky(v + b3_ref[...])                      # (eb*B, nz) f32

    # Per-basis reductions as tiny f32 matmuls with constant selection matrices
    # (row e*B+b of v belongs to batch element b).
    sel = s_ref[...]                                 # (B, eb*B)
    sel_t = st_ref[...]                              # (eb*B, B)
    v_sum = jnp.dot(sel, v, preferred_element_type=jnp.float32)        # (B, nz)
    v_mean = v_sum * (1.0 / eb)
    mean_rows = jnp.dot(sel_t, v_mean, preferred_element_type=jnp.float32)
    c = v - mean_rows
    # torch.var(dim=0) default is unbiased; guard eb == 1 (torch would give NaN).
    v_var = jnp.dot(sel, c * c, preferred_element_type=jnp.float32) * (1.0 / max(eb - 1, 1))

    out_ref[0] = z0 + v_sum
    out_ref[1] = z0 + a * v_mean
    out_ref[2] = a * a * v_var


# ------------------------------ JAX glue code ------------------------------ #

def _im2col(x_nhwc, kh=4, kw=4, stride=2, pad=1):
    # Hard-coded to the Encoder's Conv2d(4, stride=2, padding=1) config.
    n, h, w, c = x_nhwc.shape
    xp = jnp.pad(x_nhwc, ((0, 0), (pad, pad), (pad, pad), (0, 0)))
    ho = (h + 2 * pad - kh) // stride + 1
    wo = (w + 2 * pad - kw) // stride + 1
    cols = []
    for i in range(kh):
        for j in range(kw):
            cols.append(xp[:, i:i + stride * ho:stride, j:j + stride * wo:stride, :])
    p = jnp.stack(cols, axis=3)                    # (n, ho, wo, kh*kw, c)
    p = p.reshape(n * ho * wo, kh * kw * c)        # rows = N*Ho*Wo (col order kh,kw,c)
    return p, (n, ho, wo)


def conv_block(x_nhwc, wm, b, gamma, beta):
    patches, (n, ho, wo) = _im2col(x_nhwc)
    k, c_out = wm.shape
    m = patches.shape[0]
    out = _call(conv_block_kernel, (m, c_out), jnp.bfloat16,
                patches, wm, b, gamma, beta,
                flops=2 * m * k * c_out + 10 * m * c_out)
    return out.reshape(n, ho, wo, c_out)


def _nchw_rows_to_nhwc(w_rows, c, h, w):
    """Permute Linear-weight rows from torch NCHW-flatten order (c,h,w) to
    NHWC-flatten order (h,w,c) so the forward pass can flatten NHWC directly."""
    nz = w_rows.shape[1]
    return w_rows.reshape(c, h, w, nz).transpose(1, 2, 0, 3).reshape(c * h * w, nz)


def init_params(key, n_channels, n_filters, n_z, eps_dim, size):
    """Random parameters in the layouts PyTorch would store them in."""
    keys = iter(jax.random.split(key, 32))

    def rnd(shape, scale=0.05):
        return jax.random.normal(next(keys), shape, jnp.float32) * scale

    out_size = size // 16
    flat = n_filters * 8 * out_size * out_size
    conv = []
    cin = n_channels
    for mult in (1, 2, 4, 8):
        cout = n_filters * mult
        conv.append(dict(
            w=rnd((cout, cin, 4, 4)),                   # Conv2d (C_out, C_in, KH, KW)
            b=rnd((cout,)),
            gamma=jnp.ones((cout,), jnp.float32),       # BatchNorm2d affine defaults
            beta=jnp.zeros((cout,), jnp.float32),
        ))
        cin = cout
    return dict(
        conv=conv,
        z0=dict(w=rnd((n_z, flat)), b=rnd((n_z,))),     # torch Linear (out, in)
        a=dict(w=rnd((n_z, flat)), b=rnd((n_z,))),
        v=[dict(w=rnd((128, eps_dim)), b=rnd((128,))),
           dict(w=rnd((128, 128)), b=rnd((128,))),
           dict(w=rnd((n_z, 128)), b=rnd((n_z,)))],
        meta=dict(n_filters=n_filters, n_z=n_z, out_size=out_size),
    )


def prepare_params(raw):
    """One-time (outside the hot path) conversion to kernel-friendly layouts:
    bf16 matmul weights, im2col column order, NHWC row permutation, fused wz|wa."""
    meta = raw["meta"]
    c_last, hw = meta["n_filters"] * 8, meta["out_size"]

    conv = []
    for blk in raw["conv"]:
        w = blk["w"]
        c_out = w.shape[0]
        # (C_out, C_in, KH, KW) -> (KH*KW*C_in, C_out) matching im2col column order.
        wm = jnp.transpose(w, (2, 3, 1, 0)).reshape(-1, c_out).astype(jnp.bfloat16)
        conv.append((wm,
                     blk["b"].reshape(1, -1).astype(jnp.float32),
                     blk["gamma"].reshape(1, -1).astype(jnp.float32),
                     blk["beta"].reshape(1, -1).astype(jnp.float32)))

    wz = _nchw_rows_to_nhwc(raw["z0"]["w"].T, c_last, hw, hw)
    wa = _nchw_rows_to_nhwc(raw["a"]["w"].T, c_last, hw, hw)
    wza = jnp.concatenate([wz, wa], axis=1).astype(jnp.bfloat16)        # (flat, 2*n_z)
    bza = jnp.concatenate([raw["z0"]["b"], raw["a"]["b"]]).reshape(1, -1).astype(jnp.float32)

    v = []
    for lyr in raw["v"]:
        v.append(lyr["w"].T.astype(jnp.bfloat16))
        v.append(lyr["b"].reshape(1, -1).astype(jnp.float32))

    return dict(conv=conv, wza=wza, bza=bza, v=tuple(v), n_z=meta["n_z"])


def encoder_forward(params, x_nchw, eps):
    """eps: (eps_basis, batch, eps_dim) standard-normal noise, supplied
    deterministically (PyTorch draws it inside forward with torch.randn)."""
    # NCHW (PyTorch) -> NHWC once; activations travel in bf16 between blocks.
    x = jnp.transpose(x_nchw, (0, 2, 3, 1)).astype(jnp.bfloat16)
    for wm, b, g, beta in params["conv"]:
        x = conv_block(x, wm, b, g, beta)

    n = x.shape[0]
    net = x.reshape(n, -1)          # NHWC flatten; projector rows pre-permuted to match

    eb, bsz, ed = eps.shape
    eps_flat = eps.reshape(eb * bsz, ed).astype(jnp.bfloat16)
    # Constant selection matrices (folded at compile time): row e*B+b -> batch b.
    sel = jnp.tile(jnp.eye(bsz, dtype=jnp.float32), (1, eb))            # (B, eb*B)
    sel_t = sel.T                                                       # (eb*B, B)

    nz = params["n_z"]
    w1, b1, w2, b2, w3, b3 = params["v"]
    flat = net.shape[1]
    flops = (2 * n * flat * 2 * nz
             + 2 * eb * bsz * (ed * 128 + 128 * 128 + 128 * nz)
             + 6 * bsz * eb * bsz * nz)
    out = _call(functools.partial(tail_kernel, eb=eb, nz=nz),
                (3, bsz, nz), jnp.float32,
                net, params["wza"], params["bza"], eps_flat,
                w1, b1, w2, b2, w3, b3, sel, sel_t, flops=flops)
    return out[0], out[1], out[2]


if __name__ == "__main__":
    B, C, SIZE = 2, 1, 16          # size=16 -> out_size = 1
    NF, NZ = 4, 8
    EPS_BASIS, EPS_DIM = 4, 8

    key = jax.random.PRNGKey(0)
    k_x, k_eps, k_p = jax.random.split(key, 3)
    x = jax.random.normal(k_x, (B, C, SIZE, SIZE), jnp.float32)
    # torch.randn noise of the forward pass, drawn deterministically here:
    eps = jax.random.normal(k_eps, (EPS_BASIS, B, EPS_DIM), jnp.float32)
    params = prepare_params(init_params(k_p, C, NF, NZ, EPS_DIM, SIZE))

    fwd = jax.jit(functools.partial(encoder_forward, params))
    z, ez, varz = fwd(x, eps)
    jax.block_until_ready((z, ez, varz))
    assert z.shape == (B, NZ) and ez.shape == (B, NZ) and varz.shape == (B, NZ)
    assert bool(jnp.isfinite(z).all() & jnp.isfinite(ez).all() & jnp.isfinite(varz).all())
    print("KERNEL_OK")
</pallas_src>

<mosaic_0001>
module attributes {stable_mosaic.version = 11 : i64} {
  func.func @conv_block_kernel(%arg0: i32, %arg1: memref<128x16xbf16, #tpu.memory_space<vmem>>, %arg2: memref<16x4xbf16, #tpu.memory_space<vmem>>, %arg3: memref<1x4xf32, #tpu.memory_space<vmem>>, %arg4: memref<1x4xf32, #tpu.memory_space<vmem>>, %arg5: memref<1x4xf32, #tpu.memory_space<vmem>>, %arg6: memref<128x4xbf16, #tpu.memory_space<vmem>>) attributes {dimension_semantics = [#tpu.dimension_semantics<arbitrary>], iteration_bounds = array<i64: 1>, scalar_prefetch = 0 : i64, scratch_operands = 0 : i64, tpu.core_type = #tpu.core_type<tc>, window_params = [{pipeline_mode = #tpu.pipeline_mode<synchronous>, transform_indices = @transform_0, window_bounds = array<i64: 128, 16>}, {pipeline_mode = #tpu.pipeline_mode<synchronous>, transform_indices = @transform_1, window_bounds = array<i64: 16, 4>}, {pipeline_mode = #tpu.pipeline_mode<synchronous>, transform_indices = @transform_2, window_bounds = array<i64: 1, 4>}, {pipeline_mode = #tpu.pipeline_mode<synchronous>, transform_indices = @transform_3, window_bounds = array<i64: 1, 4>}, {pipeline_mode = #tpu.pipeline_mode<synchronous>, transform_indices = @transform_4, window_bounds = array<i64: 1, 4>}, {pipeline_mode = #tpu.pipeline_mode<synchronous>, transform_indices = @transform_5, window_bounds = array<i64: 128, 4>}]} {
    %c0 = arith.constant 0 : index
    %c0_0 = arith.constant 0 : index
    %0 = vector.load %arg1[%c0, %c0_0] : memref<128x16xbf16, #tpu.memory_space<vmem>>, vector<128x16xbf16>
    %c0_1 = arith.constant 0 : index
    %c0_2 = arith.constant 0 : index
    %1 = vector.load %arg2[%c0_1, %c0_2] : memref<16x4xbf16, #tpu.memory_space<vmem>>, vector<16x4xbf16>
    %cst = arith.constant dense<0.000000e+00> : vector<128x4xf32>
    %2 = tpu.matmul %0, %1, %cst {dimension_numbers = #tpu.dot_dimension_numbers<[1], [0], [0], [1], [0, 0, 1, 1], [], []>} : vector<128x16xbf16>, vector<16x4xbf16>, vector<128x4xf32> -> vector<128x4xf32>
    %c0_3 = arith.constant 0 : index
    %c0_4 = arith.constant 0 : index
    %3 = vector.load %arg3[%c0_3, %c0_4] : memref<1x4xf32, #tpu.memory_space<vmem>>, vector<1x4xf32>
    %4 = vector.broadcast %3 : vector<1x4xf32> to vector<128x4xf32>
    %5 = arith.addf %2, %4 : vector<128x4xf32>
    %cst_5 = arith.constant 2.000000e-01 : f32
    %6 = vector.broadcast %cst_5 : f32 to vector<128x4xf32>
    %7 = arith.mulf %6, %5 : vector<128x4xf32>
    %8 = arith.maximumf %5, %7 : vector<128x4xf32>
    %cst_6 = arith.constant dense<0.000000e+00> : vector<4xf32>
    %9 = vector.multi_reduction <add>, %8, %cst_6 [0] : vector<128x4xf32> to vector<4xf32>
    %10 = vector.shape_cast %9 : vector<4xf32> to vector<1x4xf32>
    %11 = arith.mulf %8, %8 : vector<128x4xf32>
    %cst_7 = arith.constant dense<0.000000e+00> : vector<4xf32>
    %12 = vector.multi_reduction <add>, %11, %cst_7 [0] : vector<128x4xf32> to vector<4xf32>
    %13 = vector.shape_cast %12 : vector<4xf32> to vector<1x4xf32>
    %cst_8 = arith.constant 7.812500e-03 : f32
    %14 = vector.broadcast %cst_8 : f32 to vector<1x4xf32>
    %15 = arith.mulf %10, %14 : vector<1x4xf32>
    %cst_9 = arith.constant 7.812500e-03 : f32
    %16 = vector.broadcast %cst_9 : f32 to vector<1x4xf32>
    %17 = arith.mulf %13, %16 : vector<1x4xf32>
    %18 = arith.mulf %15, %15 : vector<1x4xf32>
    %19 = arith.subf %17, %18 : vector<1x4xf32>
    %cst_10 = arith.constant 0.000000e+00 : f32
    %20 = vector.broadcast %cst_10 : f32 to vector<1x4xf32>
    %21 = arith.maximumf %19, %20 : vector<1x4xf32>
    %c0_11 = arith.constant 0 : index
    %c0_12 = arith.constant 0 : index
    %22 = vector.load %arg4[%c0_11, %c0_12] : memref<1x4xf32, #tpu.memory_space<vmem>>, vector<1x4xf32>
    %cst_13 = arith.constant 9.99999974E-6 : f32
    %23 = vector.broadcast %cst_13 : f32 to vector<1x4xf32>
    %24 = arith.addf %21, %23 : vector<1x4xf32>
    %25 = math.rsqrt %24 : vector<1x4xf32>
    %26 = arith.mulf %22, %25 : vector<1x4xf32>
    %c0_14 = arith.constant 0 : index
    %c0_15 = arith.constant 0 : index
    %27 = vector.load %arg5[%c0_14, %c0_15] : memref<1x4xf32, #tpu.memory_space<vmem>>, vector<1x4xf32>
    %28 = arith.mulf %15, %26 : vector<1x4xf32>
    %29 = arith.subf %27, %28 : vector<1x4xf32>
    %30 = vector.broadcast %26 : vector<1x4xf32> to vector<128x4xf32>
    %31 = arith.mulf %8, %30 : vector<128x4xf32>
    %32 = vector.broadcast %29 : vector<1x4xf32> to vector<128x4xf32>
    %33 = arith.addf %31, %32 : vector<128x4xf32>
    %34 = arith.truncf %33 : vector<128x4xf32> to vector<128x4xbf16>
    %c0_16 = arith.constant 0 : index
    %c0_17 = arith.constant 0 : index
    %35 = vector.load %arg6[%c0_16, %c0_17] : memref<128x4xbf16, #tpu.memory_space<vmem>>, vector<128x4xbf16>
    tpu.vector_store %arg6[%c0_16, %c0_17], %34 {strides = array<i32>} : memref<128x4xbf16, #tpu.memory_space<vmem>>, vector<128x4xbf16>,
    return
  }
  func.func @transform_0(%arg0: i32) -> (i32, i32) {
    %c0_i32 = arith.constant 0 : i32
    %c0_i32_0 = arith.constant 0 : i32
    %c0_i32_1 = arith.constant 0 : i32
    return %c0_i32, %c0_i32_0 : i32, i32
  }
  func.func @transform_1(%arg0: i32) -> (i32, i32) {
    %c0_i32 = arith.constant 0 : i32
    %c0_i32_0 = arith.constant 0 : i32
    %c0_i32_1 = arith.constant 0 : i32
    return %c0_i32, %c0_i32_0 : i32, i32
  }
  func.func @transform_2(%arg0: i32) -> (i32, i32) {
    %c0_i32 = arith.constant 0 : i32
    %c0_i32_0 = arith.constant 0 : i32
    %c0_i32_1 = arith.constant 0 : i32
    return %c0_i32, %c0_i32_0 : i32, i32
  }
  func.func @transform_3(%arg0: i32) -> (i32, i32) {
    %c0_i32 = arith.constant 0 : i32
    %c0_i32_0 = arith.constant 0 : i32
    %c0_i32_1 = arith.constant 0 : i32
    return %c0_i32, %c0_i32_0 : i32, i32
  }
  func.func @transform_4(%arg0: i32) -> (i32, i32) {
    %c0_i32 = arith.constant 0 : i32
    %c0_i32_0 = arith.constant 0 : i32
    %c0_i32_1 = arith.constant 0 : i32
    return %c0_i32, %c0_i32_0 : i32, i32
  }
  func.func @transform_5(%arg0: i32) -> (i32, i32) {
    %c0_i32 = arith.constant 0 : i32
    %c0_i32_0 = arith.constant 0 : i32
    %c0_i32_1 = arith.constant 0 : i32
    return %c0_i32, %c0_i32_0 : i32, i32
  }
}

module attributes {stable_mosaic.version = 11 : i64} {
  func.func @conv_block_kernel(%arg0: i32, %arg1: memref<32x64xbf16, #tpu.memory_space<vmem>>, %arg2: memref<64x8xbf16, #tpu.memory_space<vmem>>, %arg3: memref<1x8xf32, #tpu.memory_space<vmem>>, %arg4: memref<1x8xf32, #tpu.memory_space<vmem>>, %arg5: memref<1x8xf32, #tpu.memory_space<vmem>>, %arg6: memref<32x8xbf16, #tpu.memory_space<vmem>>) attributes {dimension_semantics = [#tpu.dimension_semantics<arbitrary>], iteration_bounds = array<i64: 1>, scalar_prefetch = 0 : i64, scratch_operands = 0 : i64, tpu.core_type = #tpu.core_type<tc>, window_params = [{pipeline_mode = #tpu.pipeline_mode<synchronous>, transform_indices = @transform_0, window_bounds = array<i64: 32, 64>}, {pipeline_mode = #tpu.pipeline_mode<synchronous>, transform_indices = @transform_1, window_bounds = array<i64: 64, 8>}, {pipeline_mode = #tpu.pipeline_mode<synchronous>, transform_indices = @transform_2, window_bounds = array<i64: 1, 8>}, {pipeline_mode = #tpu.pipeline_mode<synchronous>, transform_indices = @transform_3, window_bounds = array<i64: 1, 8>}, {pipeline_mode = #tpu.pipeline_mode<synchronous>, transform_indices = @transform_4, window_bounds = array<i64: 1, 8>}, {pipeline_mode = #tpu.pipeline_mode<synchronous>, transform_indices = @transform_5, window_bounds = array<i64: 32, 8>}]} {
    %c0 = arith.constant 0 : index
    %c0_0 = arith.constant 0 : index
    %0 = vector.load %arg1[%c0, %c0_0] : memref<32x64xbf16, #tpu.memory_space<vmem>>, vector<32x64xbf16>
    %c0_1 = arith.constant 0 : index
    %c0_2 = arith.constant 0 : index
    %1 = vector.load %arg2[%c0_1, %c0_2] : memref<64x8xbf16, #tpu.memory_space<vmem>>, vector<64x8xbf16>
    %cst = arith.constant dense<0.000000e+00> : vector<32x8xf32>
    %2 = tpu.matmul %0, %1, %cst {dimension_numbers = #tpu.dot_dimension_numbers<[1], [0], [0], [1], [0, 0, 1, 1], [], []>} : vector<32x64xbf16>, vector<64x8xbf16>, vector<32x8xf32> -> vector<32x8xf32>
    %c0_3 = arith.constant 0 : index
    %c0_4 = arith.constant 0 : index
    %3 = vector.load %arg3[%c0_3, %c0_4] : memref<1x8xf32, #tpu.memory_space<vmem>>, vector<1x8xf32>
    %4 = vector.broadcast %3 : vector<1x8xf32> to vector<32x8xf32>
    %5 = arith.addf %2, %4 : vector<32x8xf32>
    %cst_5 = arith.constant 2.000000e-01 : f32
    %6 = vector.broadcast %cst_5 : f32 to vector<32x8xf32>
    %7 = arith.mulf %6, %5 : vector<32x8xf32>
    %8 = arith.maximumf %5, %7 : vector<32x8xf32>
    %cst_6 = arith.constant dense<0.000000e+00> : vector<8xf32>
    %9 = vector.multi_reduction <add>, %8, %cst_6 [0] : vector<32x8xf32> to vector<8xf32>
    %10 = vector.shape_cast %9 : vector<8xf32> to vector<1x8xf32>
    %11 = arith.mulf %8, %8 : vector<32x8xf32>
    %cst_7 = arith.constant dense<0.000000e+00> : vector<8xf32>
    %12 = vector.multi_reduction <add>, %11, %cst_7 [0] : vector<32x8xf32> to vector<8xf32>
    %13 = vector.shape_cast %12 : vector<8xf32> to vector<1x8xf32>
    %cst_8 = arith.constant 3.125000e-02 : f32
    %14 = vector.broadcast %cst_8 : f32 to vector<1x8xf32>
    %15 = arith.mulf %10, %14 : vector<1x8xf32>
    %cst_9 = arith.constant 3.125000e-02 : f32
    %16 = vector.broadcast %cst_9 : f32 to vector<1x8xf32>
    %17 = arith.mulf %13, %16 : vector<1x8xf32>
    %18 = arith.mulf %15, %15 : vector<1x8xf32>
    %19 = arith.subf %17, %18 : vector<1x8xf32>
    %cst_10 = arith.constant 0.000000e+00 : f32
    %20 = vector.broadcast %cst_10 : f32 to vector<1x8xf32>
    %21 = arith.maximumf %19, %20 : vector<1x8xf32>
    %c0_11 = arith.constant 0 : index
    %c0_12 = arith.constant 0 : index
    %22 = vector.load %arg4[%c0_11, %c0_12] : memref<1x8xf32, #tpu.memory_space<vmem>>, vector<1x8xf32>
    %cst_13 = arith.constant 9.99999974E-6 : f32
    %23 = vector.broadcast %cst_13 : f32 to vector<1x8xf32>
    %24 = arith.addf %21, %23 : vector<1x8xf32>
    %25 = math.rsqrt %24 : vector<1x8xf32>
    %26 = arith.mulf %22, %25 : vector<1x8xf32>
    %c0_14 = arith.constant 0 : index
    %c0_15 = arith.constant 0 : index
    %27 = vector.load %arg5[%c0_14, %c0_15] : memref<1x8xf32, #tpu.memory_space<vmem>>, vector<1x8xf32>
    %28 = arith.mulf %15, %26 : vector<1x8xf32>
    %29 = arith.subf %27, %28 : vector<1x8xf32>
    %30 = vector.broadcast %26 : vector<1x8xf32> to vector<32x8xf32>
    %31 = arith.mulf %8, %30 : vector<32x8xf32>
    %32 = vector.broadcast %29 : vector<1x8xf32> to vector<32x8xf32>
    %33 = arith.addf %31, %32 : vector<32x8xf32>
    %34 = arith.truncf %33 : vector<32x8xf32> to vector<32x8xbf16>
    %c0_16 = arith.constant 0 : index
    %c0_17 = arith.constant 0 : index
    %35 = vector.load %arg6[%c0_16, %c0_17] : memref<32x8xbf16, #tpu.memory_space<vmem>>, vector<32x8xbf16>
    tpu.vector_store %arg6[%c0_16, %c0_17], %34 {strides = array<i32>} : memref<32x8xbf16, #tpu.memory_space<vmem>>, vector<32x8xbf16>,
    return
  }
  func.func @transform_0(%arg0: i32) -> (i32, i32) {
    %c0_i32 = arith.constant 0 : i32
    %c0_i32_0 = arith.constant 0 : i32
    %c0_i32_1 = arith.constant 0 : i32
    return %c0_i32, %c0_i32_0 : i32, i32
  }
  func.func @transform_1(%arg0: i32) -> (i32, i32) {
    %c0_i32 = arith.constant 0 : i32
    %c0_i32_0 = arith.constant 0 : i32
    %c0_i32_1 = arith.constant 0 : i32
    return %c0_i32, %c0_i32_0 : i32, i32
  }
  func.func @transform_2(%arg0: i32) -> (i32, i32) {
    %c0_i32 = arith.constant 0 : i32
    %c0_i32_0 = arith.constant 0 : i32
    %c0_i32_1 = arith.constant 0 : i32
    return %c0_i32, %c0_i32_0 : i32, i32
  }
  func.func @transform_3(%arg0: i32) -> (i32, i32) {
    %c0_i32 = arith.constant 0 : i32
    %c0_i32_0 = arith.constant 0 : i32
    %c0_i32_1 = arith.constant 0 : i32
    return %c0_i32, %c0_i32_0 : i32, i32
  }
  func.func @transform_4(%arg0: i32) -> (i32, i32) {
    %c0_i32 = arith.constant 0 : i32
    %c0_i32_0 = arith.constant 0 : i32
    %c0_i32_1 = arith.constant 0 : i32
    return %c0_i32, %c0_i32_0 : i32, i32
  }
  func.func @transform_5(%arg0: i32) -> (i32, i32) {
    %c0_i32 = arith.constant 0 : i32
    %c0_i32_0 = arith.constant 0 : i32
    %c0_i32_1 = arith.constant 0 : i32
    return %c0_i32, %c0_i32_0 : i32, i32
  }
}

module attributes {stable_mosaic.version = 11 : i64} {
  func.func @conv_block_kernel(%arg0: i32, %arg1: memref<8x128xbf16, #tpu.memory_space<vmem>>, %arg2: memref<128x16xbf16, #tpu.memory_space<vmem>>, %arg3: memref<1x16xf32, #tpu.memory_space<vmem>>, %arg4: memref<1x16xf32, #tpu.memory_space<vmem>>, %arg5: memref<1x16xf32, #tpu.memory_space<vmem>>, %arg6: memref<8x16xbf16, #tpu.memory_space<vmem>>) attributes {dimension_semantics = [#tpu.dimension_semantics<arbitrary>], iteration_bounds = array<i64: 1>, scalar_prefetch = 0 : i64, scratch_operands = 0 : i64, tpu.core_type = #tpu.core_type<tc>, window_params = [{pipeline_mode = #tpu.pipeline_mode<synchronous>, transform_indices = @transform_0, window_bounds = array<i64: 8, 128>}, {pipeline_mode = #tpu.pipeline_mode<synchronous>, transform_indices = @transform_1, window_bounds = array<i64: 128, 16>}, {pipeline_mode = #tpu.pipeline_mode<synchronous>, transform_indices = @transform_2, window_bounds = array<i64: 1, 16>}, {pipeline_mode = #tpu.pipeline_mode<synchronous>, transform_indices = @transform_3, window_bounds = array<i64: 1, 16>}, {pipeline_mode = #tpu.pipeline_mode<synchronous>, transform_indices = @transform_4, window_bounds = array<i64: 1, 16>}, {pipeline_mode = #tpu.pipeline_mode<synchronous>, transform_indices = @transform_5, window_bounds = array<i64: 8, 16>}]} {
    %c0 = arith.constant 0 : index
    %c0_0 = arith.constant 0 : index
    %0 = vector.load %arg1[%c0, %c0_0] : memref<8x128xbf16, #tpu.memory_space<vmem>>, vector<8x128xbf16>
    %c0_1 = arith.constant 0 : index
    %c0_2 = arith.constant 0 : index
    %1 = vector.load %arg2[%c0_1, %c0_2] : memref<128x16xbf16, #tpu.memory_space<vmem>>, vector<128x16xbf16>
    %cst = arith.constant dense<0.000000e+00> : vector<8x16xf32>
    %2 = tpu.matmul %0, %1, %cst {dimension_numbers = #tpu.dot_dimension_numbers<[1], [0], [0], [1], [0, 0, 1, 1], [], []>} : vector<8x128xbf16>, vector<128x16xbf16>, vector<8x16xf32> -> vector<8x16xf32>
    %c0_3 = arith.constant 0 : index
    %c0_4 = arith.constant 0 : index
    %3 = vector.load %arg3[%c0_3, %c0_4] : memref<1x16xf32, #tpu.memory_space<vmem>>, vector<1x16xf32>
    %4 = vector.broadcast %3 : vector<1x16xf32> to vector<8x16xf32>
    %5 = arith.addf %2, %4 : vector<8x16xf32>
    %cst_5 = arith.constant 2.000000e-01 : f32
    %6 = vector.broadcast %cst_5 : f32 to vector<8x16xf32>
    %7 = arith.mulf %6, %5 : vector<8x16xf32>
    %8 = arith.maximumf %5, %7 : vector<8x16xf32>
    %cst_6 = arith.constant dense<0.000000e+00> : vector<16xf32>
    %9 = vector.multi_reduction <add>, %8, %cst_6 [0] : vector<8x16xf32> to vector<16xf32>
    %10 = vector.shape_cast %9 : vector<16xf32> to vector<1x16xf32>
    %11 = arith.mulf %8, %8 : vector<8x16xf32>
    %cst_7 = arith.constant dense<0.000000e+00> : vector<16xf32>
    %12 = vector.multi_reduction <add>, %11, %cst_7 [0] : vector<8x16xf32> to vector<16xf32>
    %13 = vector.shape_cast %12 : vector<16xf32> to vector<1x16xf32>
    %cst_8 = arith.constant 1.250000e-01 : f32
    %14 = vector.broadcast %cst_8 : f32 to vector<1x16xf32>
    %15 = arith.mulf %10, %14 : vector<1x16xf32>
    %cst_9 = arith.constant 1.250000e-01 : f32
    %16 = vector.broadcast %cst_9 : f32 to vector<1x16xf32>
    %17 = arith.mulf %13, %16 : vector<1x16xf32>
    %18 = arith.mulf %15, %15 : vector<1x16xf32>
    %19 = arith.subf %17, %18 : vector<1x16xf32>
    %cst_10 = arith.constant 0.000000e+00 : f32
    %20 = vector.broadcast %cst_10 : f32 to vector<1x16xf32>
    %21 = arith.maximumf %19, %20 : vector<1x16xf32>
    %c0_11 = arith.constant 0 : index
    %c0_12 = arith.constant 0 : index
    %22 = vector.load %arg4[%c0_11, %c0_12] : memref<1x16xf32, #tpu.memory_space<vmem>>, vector<1x16xf32>
    %cst_13 = arith.constant 9.99999974E-6 : f32
    %23 = vector.broadcast %cst_13 : f32 to vector<1x16xf32>
    %24 = arith.addf %21, %23 : vector<1x16xf32>
    %25 = math.rsqrt %24 : vector<1x16xf32>
    %26 = arith.mulf %22, %25 : vector<1x16xf32>
    %c0_14 = arith.constant 0 : index
    %c0_15 = arith.constant 0 : index
    %27 = vector.load %arg5[%c0_14, %c0_15] : memref<1x16xf32, #tpu.memory_space<vmem>>, vector<1x16xf32>
    %28 = arith.mulf %15, %26 : vector<1x16xf32>
    %29 = arith.subf %27, %28 : vector<1x16xf32>
    %30 = vector.broadcast %26 : vector<1x16xf32> to vector<8x16xf32>
    %31 = arith.mulf %8, %30 : vector<8x16xf32>
    %32 = vector.broadcast %29 : vector<1x16xf32> to vector<8x16xf32>
    %33 = arith.addf %31, %32 : vector<8x16xf32>
    %34 = arith.truncf %33 : vector<8x16xf32> to vector<8x16xbf16>
    %c0_16 = arith.constant 0 : index
    %c0_17 = arith.constant 0 : index
    %35 = vector.load %arg6[%c0_16, %c0_17] : memref<8x16xbf16, #tpu.memory_space<vmem>>, vector<8x16xbf16>
    tpu.vector_store %arg6[%c0_16, %c0_17], %34 {strides = array<i32>} : memref<8x16xbf16, #tpu.memory_space<vmem>>, vector<8x16xbf16>,
    return
  }
  func.func @transform_0(%arg0: i32) -> (i32, i32) {
    %c0_i32 = arith.constant 0 : i32
    %c0_i32_0 = arith.constant 0 : i32
    %c0_i32_1 = arith.constant 0 : i32
    return %c0_i32, %c0_i32_0 : i32, i32
  }
  func.func @transform_1(%arg0: i32) -> (i32, i32) {
    %c0_i32 = arith.constant 0 : i32
    %c0_i32_0 = arith.constant 0 : i32
    %c0_i32_1 = arith.constant 0 : i32
    return %c0_i32, %c0_i32_0 : i32, i32
  }
  func.func @transform_2(%arg0: i32) -> (i32, i32) {
    %c0_i32 = arith.constant 0 : i32
    %c0_i32_0 = arith.constant 0 : i32
    %c0_i32_1 = arith.constant 0 : i32
    return %c0_i32, %c0_i32_0 : i32, i32
  }
  func.func @transform_3(%arg0: i32) -> (i32, i32) {
    %c0_i32 = arith.constant 0 : i32
    %c0_i32_0 = arith.constant 0 : i32
    %c0_i32_1 = arith.constant 0 : i32
    return %c0_i32, %c0_i32_0 : i32, i32
  }
  func.func @transform_4(%arg0: i32) -> (i32, i32) {
    %c0_i32 = arith.constant 0 : i32
    %c0_i32_0 = arith.constant 0 : i32
    %c0_i32_1 = arith.constant 0 : i32
    return %c0_i32, %c0_i32_0 : i32, i32
  }
  func.func @transform_5(%arg0: i32) -> (i32, i32) {
    %c0_i32 = arith.constant 0 : i32
    %c0_i32_0 = arith.constant 0 : i32
    %c0_i32_1 = arith.constant 0 : i32
    return %c0_i32, %c0_i32_0 : i32, i32
  }
}

module attributes {stable_mosaic.version = 11 : i64} {
  func.func @conv_block_kernel(%arg0: i32, %arg1: memref<2x256xbf16, #tpu.memory_space<vmem>>, %arg2: memref<256x32xbf16, #tpu.memory_space<vmem>>, %arg3: memref<1x32xf32, #tpu.memory_space<vmem>>, %arg4: memref<1x32xf32, #tpu.memory_space<vmem>>, %arg5: memref<1x32xf32, #tpu.memory_space<vmem>>, %arg6: memref<2x32xbf16, #tpu.memory_space<vmem>>) attributes {dimension_semantics = [#tpu.dimension_semantics<arbitrary>], iteration_bounds = array<i64: 1>, scalar_prefetch = 0 : i64, scratch_operands = 0 : i64, tpu.core_type = #tpu.core_type<tc>, window_params = [{pipeline_mode = #tpu.pipeline_mode<synchronous>, transform_indices = @transform_0, window_bounds = array<i64: 2, 256>}, {pipeline_mode = #tpu.pipeline_mode<synchronous>, transform_indices = @transform_1, window_bounds = array<i64: 256, 32>}, {pipeline_mode = #tpu.pipeline_mode<synchronous>, transform_indices = @transform_2, window_bounds = array<i64: 1, 32>}, {pipeline_mode = #tpu.pipeline_mode<synchronous>, transform_indices = @transform_3, window_bounds = array<i64: 1, 32>}, {pipeline_mode = #tpu.pipeline_mode<synchronous>, transform_indices = @transform_4, window_bounds = array<i64: 1, 32>}, {pipeline_mode = #tpu.pipeline_mode<synchronous>, transform_indices = @transform_5, window_bounds = array<i64: 2, 32>}]} {
    %c0 = arith.constant 0 : index
    %c0_0 = arith.constant 0 : index
    %0 = vector.load %arg1[%c0, %c0_0] : memref<2x256xbf16, #tpu.memory_space<vmem>>, vector<2x256xbf16>
    %c0_1 = arith.constant 0 : index
    %c0_2 = arith.constant 0 : index
    %1 = vector.load %arg2[%c0_1, %c0_2] : memref<256x32xbf16, #tpu.memory_space<vmem>>, vector<256x32xbf16>
    %cst = arith.constant dense<0.000000e+00> : vector<2x32xf32>
    %2 = tpu.matmul %0, %1, %cst {dimension_numbers = #tpu.dot_dimension_numbers<[1], [0], [0], [1], [0, 0, 1, 1], [], []>} : vector<2x256xbf16>, vector<256x32xbf16>, vector<2x32xf32> -> vector<2x32xf32>
    %c0_3 = arith.constant 0 : index
    %c0_4 = arith.constant 0 : index
    %3 = vector.load %arg3[%c0_3, %c0_4] : memref<1x32xf32, #tpu.memory_space<vmem>>, vector<1x32xf32>
    %4 = vector.broadcast %3 : vector<1x32xf32> to vector<2x32xf32>
    %5 = arith.addf %2, %4 : vector<2x32xf32>
    %cst_5 = arith.constant 2.000000e-01 : f32
    %6 = vector.broadcast %cst_5 : f32 to vector<2x32xf32>
    %7 = arith.mulf %6, %5 : vector<2x32xf32>
    %8 = arith.maximumf %5, %7 : vector<2x32xf32>
    %cst_6 = arith.constant dense<0.000000e+00> : vector<32xf32>
    %9 = vector.multi_reduction <add>, %8, %cst_6 [0] : vector<2x32xf32> to vector<32xf32>
    %10 = vector.shape_cast %9 : vector<32xf32> to vector<1x32xf32>
    %11 = arith.mulf %8, %8 : vector<2x32xf32>
    %cst_7 = arith.constant dense<0.000000e+00> : vector<32xf32>
    %12 = vector.multi_reduction <add>, %11, %cst_7 [0] : vector<2x32xf32> to vector<32xf32>
    %13 = vector.shape_cast %12 : vector<32xf32> to vector<1x32xf32>
    %cst_8 = arith.constant 5.000000e-01 : f32
    %14 = vector.broadcast %cst_8 : f32 to vector<1x32xf32>
    %15 = arith.mulf %10, %14 : vector<1x32xf32>
    %cst_9 = arith.constant 5.000000e-01 : f32
    %16 = vector.broadcast %cst_9 : f32 to vector<1x32xf32>
    %17 = arith.mulf %13, %16 : vector<1x32xf32>
    %18 = arith.mulf %15, %15 : vector<1x32xf32>
    %19 = arith.subf %17, %18 : vector<1x32xf32>
    %cst_10 = arith.constant 0.000000e+00 : f32
    %20 = vector.broadcast %cst_10 : f32 to vector<1x32xf32>
    %21 = arith.maximumf %19, %20 : vector<1x32xf32>
    %c0_11 = arith.constant 0 : index
    %c0_12 = arith.constant 0 : index
    %22 = vector.load %arg4[%c0_11, %c0_12] : memref<1x32xf32, #tpu.memory_space<vmem>>, vector<1x32xf32>
    %cst_13 = arith.constant 9.99999974E-6 : f32
    %23 = vector.broadcast %cst_13 : f32 to vector<1x32xf32>
    %24 = arith.addf %21, %23 : vector<1x32xf32>
    %25 = math.rsqrt %24 : vector<1x32xf32>
    %26 = arith.mulf %22, %25 : vector<1x32xf32>
    %c0_14 = arith.constant 0 : index
    %c0_15 = arith.constant 0 : index
    %27 = vector.load %arg5[%c0_14, %c0_15] : memref<1x32xf32, #tpu.memory_space<vmem>>, vector<1x32xf32>
    %28 = arith.mulf %15, %26 : vector<1x32xf32>
    %29 = arith.subf %27, %28 : vector<1x32xf32>
    %30 = vector.broadcast %26 : vector<1x32xf32> to vector<2x32xf32>
    %31 = arith.mulf %8, %30 : vector<2x32xf32>
    %32 = vector.broadcast %29 : vector<1x32xf32> to vector<2x32xf32>
    %33 = arith.addf %31, %32 : vector<2x32xf32>
    %34 = arith.truncf %33 : vector<2x32xf32> to vector<2x32xbf16>
    %c0_16 = arith.constant 0 : index
    %c0_17 = arith.constant 0 : index
    %35 = vector.load %arg6[%c0_16, %c0_17] : memref<2x32xbf16, #tpu.memory_space<vmem>>, vector<2x32xbf16>
    tpu.vector_store %arg6[%c0_16, %c0_17], %34 {strides = array<i32>} : memref<2x32xbf16, #tpu.memory_space<vmem>>, vector<2x32xbf16>,
    return
  }
  func.func @transform_0(%arg0: i32) -> (i32, i32) {
    %c0_i32 = arith.constant 0 : i32
    %c0_i32_0 = arith.constant 0 : i32
    %c0_i32_1 = arith.constant 0 : i32
    return %c0_i32, %c0_i32_0 : i32, i32
  }
  func.func @transform_1(%arg0: i32) -> (i32, i32) {
    %c0_i32 = arith.constant 0 : i32
    %c0_i32_0 = arith.constant 0 : i32
    %c0_i32_1 = arith.constant 0 : i32
    return %c0_i32, %c0_i32_0 : i32, i32
  }
  func.func @transform_2(%arg0: i32) -> (i32, i32) {
    %c0_i32 = arith.constant 0 : i32
    %c0_i32_0 = arith.constant 0 : i32
    %c0_i32_1 = arith.constant 0 : i32
    return %c0_i32, %c0_i32_0 : i32, i32
  }
  func.func @transform_3(%arg0: i32) -> (i32, i32) {
    %c0_i32 = arith.constant 0 : i32
    %c0_i32_0 = arith.constant 0 : i32
    %c0_i32_1 = arith.constant 0 : i32
    return %c0_i32, %c0_i32_0 : i32, i32
  }
  func.func @transform_4(%arg0: i32) -> (i32, i32) {
    %c0_i32 = arith.constant 0 : i32
    %c0_i32_0 = arith.constant 0 : i32
    %c0_i32_1 = arith.constant 0 : i32
    return %c0_i32, %c0_i32_0 : i32, i32
  }
  func.func @transform_5(%arg0: i32) -> (i32, i32) {
    %c0_i32 = arith.constant 0 : i32
    %c0_i32_0 = arith.constant 0 : i32
    %c0_i32_1 = arith.constant 0 : i32
    return %c0_i32, %c0_i32_0 : i32, i32
  }
}

module attributes {stable_mosaic.version = 11 : i64} {
  func.func @tail_kernel(%arg0: i32, %arg1: memref<2x32xbf16, #tpu.memory_space<vmem>>, %arg2: memref<32x16xbf16, #tpu.memory_space<vmem>>, %arg3: memref<1x16xf32, #tpu.memory_space<vmem>>, %arg4: memref<8x8xbf16, #tpu.memory_space<vmem>>, %arg5: memref<8x128xbf16, #tpu.memory_space<vmem>>, %arg6: memref<1x128xf32, #tpu.memory_space<vmem>>, %arg7: memref<128x128xbf16, #tpu.memory_space<vmem>>, %arg8: memref<1x128xf32, #tpu.memory_space<vmem>>, %arg9: memref<128x8xbf16, #tpu.memory_space<vmem>>, %arg10: memref<1x8xf32, #tpu.memory_space<vmem>>, %arg11: memref<2x8xf32, #tpu.memory_space<vmem>>, %arg12: memref<8x2xf32, #tpu.memory_space<vmem>>, %arg13: memref<3x2x8xf32, #tpu.memory_space<vmem>>) attributes {dimension_semantics = [#tpu.dimension_semantics<arbitrary>], iteration_bounds = array<i64: 1>, scalar_prefetch = 0 : i64, scratch_operands = 0 : i64, tpu.core_type = #tpu.core_type<tc>, window_params = [{pipeline_mode = #tpu.pipeline_mode<synchronous>, transform_indices = @transform_0, window_bounds = array<i64: 2, 32>}, {pipeline_mode = #tpu.pipeline_mode<synchronous>, transform_indices = @transform_1, window_bounds = array<i64: 32, 16>}, {pipeline_mode = #tpu.pipeline_mode<synchronous>, transform_indices = @transform_2, window_bounds = array<i64: 1, 16>}, {pipeline_mode = #tpu.pipeline_mode<synchronous>, transform_indices = @transform_3, window_bounds = array<i64: 8, 8>}, {pipeline_mode = #tpu.pipeline_mode<synchronous>, transform_indices = @transform_4, window_bounds = array<i64: 8, 128>}, {pipeline_mode = #tpu.pipeline_mode<synchronous>, transform_indices = @transform_5, window_bounds = array<i64: 1, 128>}, {pipeline_mode = #tpu.pipeline_mode<synchronous>, transform_indices = @transform_6, window_bounds = array<i64: 128, 128>}, {pipeline_mode = #tpu.pipeline_mode<synchronous>, transform_indices = @transform_7, window_bounds = array<i64: 1, 128>}, {pipeline_mode = #tpu.pipeline_mode<synchronous>, transform_indices = @transform_8, window_bounds = array<i64: 128, 8>}, {pipeline_mode = #tpu.pipeline_mode<synchronous>, transform_indices = @transform_9, window_bounds = array<i64: 1, 8>}, {pipeline_mode = #tpu.pipeline_mode<synchronous>, transform_indices = @transform_10, window_bounds = array<i64: 2, 8>}, {pipeline_mode = #tpu.pipeline_mode<synchronous>, transform_indices = @transform_11, window_bounds = array<i64: 8, 2>}, {pipeline_mode = #tpu.pipeline_mode<synchronous>, transform_indices = @transform_12, window_bounds = array<i64: 3, 2, 8>}]} {
    %c0 = arith.constant 0 : index
    %c0_0 = arith.constant 0 : index
    %0 = vector.load %arg1[%c0, %c0_0] : memref<2x32xbf16, #tpu.memory_space<vmem>>, vector<2x32xbf16>
    %c0_1 = arith.constant 0 : index
    %c0_2 = arith.constant 0 : index
    %1 = vector.load %arg2[%c0_1, %c0_2] : memref<32x16xbf16, #tpu.memory_space<vmem>>, vector<32x16xbf16>
    %cst = arith.constant dense<0.000000e+00> : vector<2x16xf32>
    %2 = tpu.matmul %0, %1, %cst {dimension_numbers = #tpu.dot_dimension_numbers<[1], [0], [0], [1], [0, 0, 1, 1], [], []>} : vector<2x32xbf16>, vector<32x16xbf16>, vector<2x16xf32> -> vector<2x16xf32>
    %c0_3 = arith.constant 0 : index
    %c0_4 = arith.constant 0 : index
    %3 = vector.load %arg3[%c0_3, %c0_4] : memref<1x16xf32, #tpu.memory_space<vmem>>, vector<1x16xf32>
    %4 = vector.broadcast %3 : vector<1x16xf32> to vector<2x16xf32>
    %5 = arith.addf %2, %4 : vector<2x16xf32>
    %cst_5 = arith.constant 2.000000e-01 : f32
    %6 = vector.broadcast %cst_5 : f32 to vector<2x16xf32>
    %7 = arith.mulf %6, %5 : vector<2x16xf32>
    %8 = arith.maximumf %5, %7 : vector<2x16xf32>
    %9 = vector.extract_strided_slice %8 {offsets = [0, 0], sizes = [2, 8], strides = [1, 1]} : vector<2x16xf32> to vector<2x8xf32>
    %10 = vector.extract_strided_slice %8 {offsets = [0, 8], sizes = [2, 8], strides = [1, 1]} : vector<2x16xf32> to vector<2x8xf32>
    %c0_6 = arith.constant 0 : index
    %c0_7 = arith.constant 0 : index
    %11 = vector.load %arg4[%c0_6, %c0_7] : memref<8x8xbf16, #tpu.memory_space<vmem>>, vector<8x8xbf16>
    %c0_8 = arith.constant 0 : index
    %c0_9 = arith.constant 0 : index
    %12 = vector.load %arg5[%c0_8, %c0_9] : memref<8x128xbf16, #tpu.memory_space<vmem>>, vector<8x128xbf16>
    %cst_10 = arith.constant dense<0.000000e+00> : vector<8x128xf32>
    %13 = tpu.matmul %11, %12, %cst_10 {dimension_numbers = #tpu.dot_dimension_numbers<[1], [0], [0], [1], [0, 0, 1, 1], [], []>} : vector<8x8xbf16>, vector<8x128xbf16>, vector<8x128xf32> -> vector<8x128xf32>
    %c0_11 = arith.constant 0 : index
    %c0_12 = arith.constant 0 : index
    %14 = vector.load %arg6[%c0_11, %c0_12] : memref<1x128xf32, #tpu.memory_space<vmem>>, vector<1x128xf32>
    %15 = vector.broadcast %14 : vector<1x128xf32> to vector<8x128xf32>
    %16 = arith.addf %13, %15 : vector<8x128xf32>
    %cst_13 = arith.constant 2.000000e-01 : f32
    %17 = vector.broadcast %cst_13 : f32 to vector<8x128xf32>
    %18 = arith.mulf %17, %16 : vector<8x128xf32>
    %19 = arith.maximumf %16, %18 : vector<8x128xf32>
    %20 = arith.truncf %19 : vector<8x128xf32> to vector<8x128xbf16>
    %c0_14 = arith.constant 0 : index
    %c0_15 = arith.constant 0 : index
    %21 = vector.load %arg7[%c0_14, %c0_15] : memref<128x128xbf16, #tpu.memory_space<vmem>>, vector<128x128xbf16>
    %cst_16 = arith.constant dense<0.000000e+00> : vector<8x128xf32>
    %22 = tpu.matmul %20, %21, %cst_16 {dimension_numbers = #tpu.dot_dimension_numbers<[1], [0], [0], [1], [0, 0, 1, 1], [], []>} : vector<8x128xbf16>, vector<128x128xbf16>, vector<8x128xf32> -> vector<8x128xf32>
    %c0_17 = arith.constant 0 : index
    %c0_18 = arith.constant 0 : index
    %23 = vector.load %arg8[%c0_17, %c0_18] : memref<1x128xf32, #tpu.memory_space<vmem>>, vector<1x128xf32>
    %24 = vector.broadcast %23 : vector<1x128xf32> to vector<8x128xf32>
    %25 = arith.addf %22, %24 : vector<8x128xf32>
    %cst_19 = arith.constant 2.000000e-01 : f32
    %26 = vector.broadcast %cst_19 : f32 to vector<8x128xf32>
    %27 = arith.mulf %26, %25 : vector<8x128xf32>
    %28 = arith.maximumf %25, %27 : vector<8x128xf32>
    %29 = arith.truncf %28 : vector<8x128xf32> to vector<8x128xbf16>
    %c0_20 = arith.constant 0 : index
    %c0_21 = arith.constant 0 : index
    %30 = vector.load %arg9[%c0_20, %c0_21] : memref<128x8xbf16, #tpu.memory_space<vmem>>, vector<128x8xbf16>
    %cst_22 = arith.constant dense<0.000000e+00> : vector<8x8xf32>
    %31 = tpu.matmul %29, %30, %cst_22 {dimension_numbers = #tpu.dot_dimension_numbers<[1], [0], [0], [1], [0, 0, 1, 1], [], []>} : vector<8x128xbf16>, vector<128x8xbf16>, vector<8x8xf32> -> vector<8x8xf32>
    %c0_23 = arith.constant 0 : index
    %c0_24 = arith.constant 0 : index
    %32 = vector.load %arg10[%c0_23, %c0_24] : memref<1x8xf32, #tpu.memory_space<vmem>>, vector<1x8xf32>
    %33 = vector.broadcast %32 : vector<1x8xf32> to vector<8x8xf32>
    %34 = arith.addf %31, %33 : vector<8x8xf32>
    %cst_25 = arith.constant 2.000000e-01 : f32
    %35 = vector.broadcast %cst_25 : f32 to vector<8x8xf32>
    %36 = arith.mulf %35, %34 : vector<8x8xf32>
    %37 = arith.maximumf %34, %36 : vector<8x8xf32>
    %c0_26 = arith.constant 0 : index
    %c0_27 = arith.constant 0 : index
    %38 = vector.load %arg11[%c0_26, %c0_27] : memref<2x8xf32, #tpu.memory_space<vmem>>, vector<2x8xf32>
    %c0_28 = arith.constant 0 : index
    %c0_29 = arith.constant 0 : index
    %39 = vector.load %arg12[%c0_28, %c0_29] : memref<8x2xf32, #tpu.memory_space<vmem>>, vector<8x2xf32>
    %cst_30 = arith.constant dense<0.000000e+00> : vector<2x8xf32>
    %40 = tpu.matmul %38, %37, %cst_30 {dimension_numbers = #tpu.dot_dimension_numbers<[1], [0], [0], [1], [0, 0, 1, 1], [], []>} : vector<2x8xf32>, vector<8x8xf32>, vector<2x8xf32> -> vector<2x8xf32>
    %cst_31 = arith.constant 2.500000e-01 : f32
    %41 = vector.broadcast %cst_31 : f32 to vector<2x8xf32>
    %42 = arith.mulf %40, %41 : vector<2x8xf32>
    %cst_32 = arith.constant dense<0.000000e+00> : vector<8x8xf32>
    %43 = tpu.matmul %39, %42, %cst_32 {dimension_numbers = #tpu.dot_dimension_numbers<[1], [0], [0], [1], [0, 0, 1, 1], [], []>} : vector<8x2xf32>, vector<2x8xf32>, vector<8x8xf32> -> vector<8x8xf32>
    %44 = arith.subf %37, %43 : vector<8x8xf32>
    %45 = arith.mulf %44, %44 : vector<8x8xf32>
    %cst_33 = arith.constant dense<0.000000e+00> : vector<2x8xf32>
    %46 = tpu.matmul %38, %45, %cst_33 {dimension_numbers = #tpu.dot_dimension_numbers<[1], [0], [0], [1], [0, 0, 1, 1], [], []>} : vector<2x8xf32>, vector<8x8xf32>, vector<2x8xf32> -> vector<2x8xf32>
    %cst_34 = arith.constant 0.333333343 : f32
    %47 = vector.broadcast %cst_34 : f32 to vector<2x8xf32>
    %48 = arith.mulf %46, %47 : vector<2x8xf32>
    %49 = arith.addf %9, %40 : vector<2x8xf32>
    %c0_35 = arith.constant 0 : index
    %c0_36 = arith.constant 0 : index
    %c0_37 = arith.constant 0 : index
    %50 = vector.load %arg13[%c0_35, %c0_36, %c0_37] : memref<3x2x8xf32, #tpu.memory_space<vmem>>, vector<1x2x8xf32>
    %51 = vector.shape_cast %50 : vector<1x2x8xf32> to vector<2x8xf32>
    %52 = vector.shape_cast %49 : vector<2x8xf32> to vector<1x2x8xf32>
    tpu.vector_store %arg13[%c0_35, %c0_36, %c0_37], %52 {strides = array<i32>} : memref<3x2x8xf32, #tpu.memory_space<vmem>>, vector<1x2x8xf32>,
    %53 = arith.mulf %10, %42 : vector<2x8xf32>
    %54 = arith.addf %9, %53 : vector<2x8xf32>
    %c1 = arith.constant 1 : index
    %c0_38 = arith.constant 0 : index
    %c0_39 = arith.constant 0 : index
    %55 = vector.load %arg13[%c1, %c0_38, %c0_39] : memref<3x2x8xf32, #tpu.memory_space<vmem>>, vector<1x2x8xf32>
    %56 = vector.shape_cast %55 : vector<1x2x8xf32> to vector<2x8xf32>
    %57 = vector.shape_cast %54 : vector<2x8xf32> to vector<1x2x8xf32>
    tpu.vector_store %arg13[%c1, %c0_38, %c0_39], %57 {strides = array<i32>} : memref<3x2x8xf32, #tpu.memory_space<vmem>>, vector<1x2x8xf32>,
    %58 = arith.mulf %10, %10 : vector<2x8xf32>
    %59 = arith.mulf %58, %48 : vector<2x8xf32>
    %c2 = arith.constant 2 : index
    %c0_40 = arith.constant 0 : index
    %c0_41 = arith.constant 0 : index
    %60 = vector.load %arg13[%c2, %c0_40, %c0_41] : memref<3x2x8xf32, #tpu.memory_space<vmem>>, vector<1x2x8xf32>
    %61 = vector.shape_cast %60 : vector<1x2x8xf32> to vector<2x8xf32>
    %62 = vector.shape_cast %59 : vector<2x8xf32> to vector<1x2x8xf32>
    tpu.vector_store %arg13[%c2, %c0_40, %c0_41], %62 {strides = array<i32>} : memref<3x2x8xf32, #tpu.memory_space<vmem>>, vector<1x2x8xf32>,
    return
  }
  func.func @transform_0(%arg0: i32) -> (i32, i32) {
    %c0_i32 = arith.constant 0 : i32
    %c0_i32_0 = arith.constant 0 : i32
    %c0_i32_1 = arith.constant 0 : i32
    return %c0_i32, %c0_i32_0 : i32, i32
  }
  func.func @transform_1(%arg0: i32) -> (i32, i32) {
    %c0_i32 = arith.constant 0 : i32
    %c0_i32_0 = arith.constant 0 : i32
    %c0_i32_1 = arith.constant 0 : i32
    return %c0_i32, %c0_i32_0 : i32, i32
  }
  func.func @transform_2(%arg0: i32) -> (i32, i32) {
    %c0_i32 = arith.constant 0 : i32
    %c0_i32_0 = arith.constant 0 : i32
    %c0_i32_1 = arith.constant 0 : i32
    return %c0_i32, %c0_i32_0 : i32, i32
  }
  func.func @transform_3(%arg0: i32) -> (i32, i32) {
    %c0_i32 = arith.constant 0 : i32
    %c0_i32_0 = arith.constant 0 : i32
    %c0_i32_1 = arith.constant 0 : i32
    return %c0_i32, %c0_i32_0 : i32, i32
  }
  func.func @transform_4(%arg0: i32) -> (i32, i32) {
    %c0_i32 = arith.constant 0 : i32
    %c0_i32_0 = arith.constant 0 : i32
    %c0_i32_1 = arith.constant 0 : i32
    return %c0_i32, %c0_i32_0 : i32, i32
  }
  func.func @transform_5(%arg0: i32) -> (i32, i32) {
    %c0_i32 = arith.constant 0 : i32
    %c0_i32_0 = arith.constant 0 : i32
    %c0_i32_1 = arith.constant 0 : i32
    return %c0_i32, %c0_i32_0 : i32, i32
  }
  func.func @transform_6(%arg0: i32) -> (i32, i32) {
    %c0_i32 = arith.constant 0 : i32
    %c0_i32_0 = arith.constant 0 : i32
    %c0_i32_1 = arith.constant 0 : i32
    return %c0_i32, %c0_i32_0 : i32, i32
  }
  func.func @transform_7(%arg0: i32) -> (i32, i32) {
    %c0_i32 = arith.constant 0 : i32
    %c0_i32_0 = arith.constant 0 : i32
    %c0_i32_1 = arith.constant 0 : i32
    return %c0_i32, %c0_i32_0 : i32, i32
  }
  func.func @transform_8(%arg0: i32) -> (i32, i32) {
    %c0_i32 = arith.constant 0 : i32
    %c0_i32_0 = arith.constant 0 : i32
    %c0_i32_1 = arith.constant 0 : i32
    return %c0_i32, %c0_i32_0 : i32, i32
  }
  func.func @transform_9(%arg0: i32) -> (i32, i32) {
    %c0_i32 = arith.constant 0 : i32
    %c0_i32_0 = arith.constant 0 : i32
    %c0_i32_1 = arith.constant 0 : i32
    return %c0_i32, %c0_i32_0 : i32, i32
  }
  func.func @transform_10(%arg0: i32) -> (i32, i32) {
    %c0_i32 = arith.constant 0 : i32
    %c0_i32_0 = arith.constant 0 : i32
    %c0_i32_1 = arith.constant 0 : i32
    return %c0_i32, %c0_i32_0 : i32, i32
  }
  func.func @transform_11(%arg0: i32) -> (i32, i32) {
    %c0_i32 = arith.constant 0 : i32
    %c0_i32_0 = arith.constant 0 : i32
    %c0_i32_1 = arith.constant 0 : i32
    return %c0_i32, %c0_i32_0 : i32, i32
  }
  func.func @transform_12(%arg0: i32) -> (i32, i32, i32) {
    %c0_i32 = arith.constant 0 : i32
    %c0_i32_0 = arith.constant 0 : i32
    %c0_i32_1 = arith.constant 0 : i32
    %c0_i32_2 = arith.constant 0 : i32
    return %c0_i32, %c0_i32_0, %c0_i32_1 : i32, i32, i32
  }
}

</mosaic_0001>

<llo_original>
// kernel: encoder_forward.5
$region0: #{encoder_forward.5}
  #allocation0 [shape = 'u32[]', space=smem, size = 0x4, offset = 0x4, fixed_abs, tag = 'smem constant byte address 0x4 - core index']
  #allocation1 [shape = 'u32[144,128]{1,0:T(1,128)}', space=vmem, size = 0x12000, scoped, tag = 'internal scratch']
  %s0 = inlined_call_operand.vmem [shape: bf16[128,16], index: 0, kind: input, shape index: {}]
  %s1 = inlined_call_operand.vmem [shape: bf16[16,4], index: 1, kind: input, shape index: {}]
  %s2 = inlined_call_operand.vmem [shape: f32[1,4], index: 2, kind: input, shape index: {}]
  %s3 = inlined_call_operand.vmem [shape: f32[1,4], index: 3, kind: input, shape index: {}]
  %s4 = inlined_call_operand.vmem [shape: f32[1,4], index: 4, kind: input, shape index: {}]
  %s5 = inlined_call_operand.vmem [shape: bf16[128,4], index: 5, kind: output, shape index: {}]
  %s6 = sld [smem:[#allocation0]]
  $region30: #{encoder_forward.5} parent=0
    _
  %s8 = ssub.s32 1, %s6
  %s9 = scalar_select 0, %s8, %s6
  // Predicated region
  $region2: #{encoder_forward.5} parent=0 // pred_check
    _
  $region3: #{encoder_forward.5} parent=0 // pred_check_branch
    %11 = sbr.rel (0) target = $region5
  $region4: #{encoder_forward.5} parent=0 // pred_region
    _
  $region5: #{encoder_forward.5} parent=0 // pred_fallthru
    _
  // Predicated region
  $region6: #{encoder_forward.5} parent=0 // pred_check
    _
  $region7: #{encoder_forward.5} parent=0 // pred_check_branch
    %13 = sbr.rel (0) target = $region9
  $region8: #{encoder_forward.5} parent=0 // pred_region
    _
  $region9: #{encoder_forward.5} parent=0 // pred_fallthru
    _
  // Predicated region
  $region10: #{encoder_forward.5} parent=0 // pred_check
    _
  $region11: #{encoder_forward.5} parent=0 // pred_check_branch
    %15 = sbr.rel (0) target = $region13
  $region12: #{encoder_forward.5} parent=0 // pred_region
    _
  $region13: #{encoder_forward.5} parent=0 // pred_fallthru
    _
  // Predicated region
  $region14: #{encoder_forward.5} parent=0 // pred_check
    _
  $region15: #{encoder_forward.5} parent=0 // pred_check_branch
    %17 = sbr.rel (0) target = $region17
  $region16: #{encoder_forward.5} parent=0 // pred_region
    _
  $region17: #{encoder_forward.5} parent=0 // pred_fallthru
    _
  // Predicated region
  $region18: #{encoder_forward.5} parent=0 // pred_check
    _
  $region19: #{encoder_forward.5} parent=0 // pred_check_branch
    %19 = sbr.rel (0) target = $region21
  $region20: #{encoder_forward.5} parent=0 // pred_region
    _
  $region21: #{encoder_forward.5} parent=0 // pred_fallthru
    _
  %v21 = vld [vmem:[%s0] sm:$0xf]
  %v22 = vld [vmem:[%s0 + $0x4] sm:$0xf]
  %v23 = vld [vmem:[%s0 + $0x8] sm:$0xf]
  %v24 = vld [vmem:[%s0 + $0xc] sm:$0xf]
  %v25 = vld [vmem:[%s0 + $0x10] sm:$0xf]
  %v26 = vld [vmem:[%s0 + $0x14] sm:$0xf]
  %v27 = vld [vmem:[%s0 + $0x18] sm:$0xf]
  %v28 = vld [vmem:[%s0 + $0x1c] sm:$0xf]
  %v29 = vld [vmem:[%s0 + $0x20] sm:$0xf]
  %v30 = vld [vmem:[%s0 + $0x24] sm:$0xf]
  %v31 = vld [vmem:[%s0 + $0x28] sm:$0xf]
  %v32 = vld [vmem:[%s0 + $0x2c] sm:$0xf]
  %v33 = vld [vmem:[%s0 + $0x30] sm:$0xf]
  %v34 = vld [vmem:[%s0 + $0x34] sm:$0xf]
  %v35 = vld [vmem:[%s0 + $0x38] sm:$0xf]
  %v36 = vld [vmem:[%s0 + $0x3c] sm:$0xf]
  %v37 = vld [vmem:[%s1] sm:$0xf]
  %v38 = vld [vmem:[%s1 + $0x4] sm:$0xf]
  %v39 = vld [vmem:[%s2] sm:$0x1]
  %v41 = vlaneseq
  %v42 = vshrl.u32 %v41, 7
  %v43 = vsub.s32 0, %v42
  %v44 = vrot.slane %v39, %v43
  %v62 = vunpack.c.l.b16 %v21
  %v63 = vunpack.c.l.b16 %v22
  %v64 = vunpack.c.l.b16 %v23
  %v65 = vunpack.c.l.b16 %v24
  %v66 = vunpack.c.l.b16 %v25
  %v67 = vunpack.c.l.b16 %v26
  %v68 = vunpack.c.l.b16 %v27
  %v69 = vunpack.c.l.b16 %v28
  %v70 = vunpack.c.l.b16 %v29
  %v71 = vunpack.c.l.b16 %v30
  %v72 = vunpack.c.l.b16 %v31
  %v73 = vunpack.c.l.b16 %v32
  %v74 = vunpack.c.l.b16 %v33
  %v75 = vunpack.c.l.b16 %v34
  %v76 = vunpack.c.l.b16 %v35
  %v77 = vunpack.c.l.b16 %v36
  %v78 = vpack.c.b16 %v63, %v62
  %v79 = vpack.c.b16 %v65, %v64
  %v80 = vpack.c.b16 %v67, %v66
  %v81 = vpack.c.b16 %v69, %v68
  %v82 = vpack.c.b16 %v71, %v70
  %v83 = vpack.c.b16 %v73, %v72
  %v84 = vpack.c.b16 %v75, %v74
  %v85 = vpack.c.b16 %v77, %v76
  %v88 = vunpack.c.l.b16 %v37
  %v89 = vunpack.c.l.b16 %v38
  %v90 = vpack.c.b16 %v89, %v88
  %vm92 = vcmask 130048
  %v94 = vsel %vm92, %v78, 0
  %v97 = vsel %vm92, %v79, 0
  %v100 = vsel %vm92, %v80, 0
  %v103 = vsel %vm92, %v81, 0
  %v106 = vsel %vm92, %v82, 0
  %v109 = vsel %vm92, %v83, 0
  %v112 = vsel %vm92, %v84, 0
  %v115 = vsel %vm92, %v85, 0
  %117 = vmatprep.subr.bf16.mxu0 0
  %118 = vmatpush1.bf16.msra.mxu0 %v90
  %119 = vmatprep.subr.bf16.mxu0 0
  %120 = vmatpush1.bf16.msra.mxu0 0
  %121 = vmatprep.subr.bf16.mxu0 0
  %122 = vmatpush1.bf16.msra.mxu0 0
  %123 = vmatprep.subr.bf16.mxu0 0
  %124 = vmatpush1.bf16.msra.mxu0 0
  %125 = vmatprep.subr.bf16.mxu0 0
  %126 = vmatpush1.bf16.msra.mxu0 0
  %127 = vmatprep.subr.bf16.mxu0 0
  %128 = vmatpush1.bf16.msra.mxu0 0
  %129 = vmatprep.subr.bf16.mxu0 0
  %130 = vmatpush1.bf16.msra.mxu0 0
  %131 = vmatprep.subr.bf16.mxu0 0
  %132 = vmatpush1.bf16.msra.mxu0 0
  %133 = vmatprep.subr.bf16.mxu0 0
  %134 = vmatpush1.bf16.msra.mxu0 0
  %135 = vmatprep.subr.bf16.mxu0 0
  %136 = vmatpush1.bf16.msra.mxu0 0
  %137 = vmatprep.subr.bf16.mxu0 0
  %138 = vmatpush1.bf16.msra.mxu0 0
  %139 = vmatprep.subr.bf16.mxu0 0
  %140 = vmatpush1.bf16.msra.mxu0 0
  %141 = vmatprep.subr.bf16.mxu0 0
  %142 = vmatpush1.bf16.msra.mxu0 0
  %143 = vmatprep.subr.bf16.mxu0 0
  %144 = vmatpush1.bf16.msra.mxu0 0
  %145 = vmatprep.subr.bf16.mxu0 0
  %146 = vmatpush1.bf16.msra.mxu0 0
  %147 = vmatprep.subr.bf16.mxu0 0
  %148 = vmatpush1.bf16.msra.mxu0 0
  %149 = vmatprep.mubr.bf16.mxu0 0
  %150 = vmatmul.mubr.bf16.gmra.mrb[0].mxu0 %v94
  %v151 = vpop.f32.mrb[0].mxu0
  %v152 = vadd.f32 %v44, %v151
  %v153 = vpop.f32.mrb[0].mxu0
  %v154 = vpop.f32.mrb[0].mxu0
  %v155 = vadd.f32 %v44, %v154
  %v156 = vpop.f32.mrb[0].mxu0
  %157 = vmatprep.mubr.bf16.mxu0 0
  %158 = vmatmul.mubr.bf16.gmra.mrb[0].mxu0 %v97
  %v159 = vpop.f32.mrb[0].mxu0
  %v160 = vadd.f32 %v44, %v159
  %v161 = vpop.f32.mrb[0].mxu0
  %v162 = vpop.f32.mrb[0].mxu0
  %v163 = vadd.f32 %v44, %v162
  %v164 = vpop.f32.mrb[0].mxu0
  %165 = vmatprep.mubr.bf16.mxu0 0
  %166 = vmatmul.mubr.bf16.gmra.mrb[0].mxu0 %v100
  %v167 = vpop.f32.mrb[0].mxu0
  %v168 = vadd.f32 %v44, %v167
  %v169 = vpop.f32.mrb[0].mxu0
  %v170 = vpop.f32.mrb[0].mxu0
  %v171 = vadd.f32 %v44, %v170
  %v172 = vpop.f32.mrb[0].mxu0
  %173 = vmatprep.mubr.bf16.mxu0 0
  %174 = vmatmul.mubr.bf16.gmra.mrb[0].mxu0 %v103
  %v175 = vpop.f32.mrb[0].mxu0
  %v176 = vadd.f32 %v44, %v175
  %v177 = vpop.f32.mrb[0].mxu0
  %v178 = vpop.f32.mrb[0].mxu0
  %v179 = vadd.f32 %v44, %v178
  %v180 = vpop.f32.mrb[0].mxu0
  %181 = vmatprep.mubr.bf16.mxu0 0
  %182 = vmatmul.mubr.bf16.gmra.mrb[0].mxu0 %v106
  %v183 = vpop.f32.mrb[0].mxu0
  %v184 = vadd.f32 %v44, %v183
  %v185 = vpop.f32.mrb[0].mxu0
  %v186 = vpop.f32.mrb[0].mxu0
  %v187 = vadd.f32 %v44, %v186
  %v188 = vpop.f32.mrb[0].mxu0
  %189 = vmatprep.mubr.bf16.mxu0 0
  %190 = vmatmul.mubr.bf16.gmra.mrb[0].mxu0 %v109
  %v191 = vpop.f32.mrb[0].mxu0
  %v192 = vadd.f32 %v44, %v191
  %v193 = vpop.f32.mrb[0].mxu0
  %v194 = vpop.f32.mrb[0].mxu0
  %v195 = vadd.f32 %v44, %v194
  %v196 = vpop.f32.mrb[0].mxu0
  %197 = vmatprep.mubr.bf16.mxu0 0
  %198 = vmatmul.mubr.bf16.gmra.mrb[0].mxu0 %v112
  %v199 = vpop.f32.mrb[0].mxu0
  %v200 = vadd.f32 %v44, %v199
  %v201 = vpop.f32.mrb[0].mxu0
  %v202 = vpop.f32.mrb[0].mxu0
  %v203 = vadd.f32 %v44, %v202
  %v204 = vpop.f32.mrb[0].mxu0
  %205 = vmatprep.mubr.bf16.mxu0 0
  %206 = vmatmul.mubr.bf16.gmra.mrb[0].mxu0 %v115
  %v207 = vpop.f32.mrb[0].mxu0
  %v208 = vadd.f32 %v44, %v207
  %v209 = vpop.f32.mrb[0].mxu0
  %v210 = vpop.f32.mrb[0].mxu0
  %v211 = vadd.f32 %v44, %v210
  %v212 = vpop.f32.mrb[0].mxu0
  %213 = vdwg.mxu0
  %v214 = vmul.f32 %v152, 0.2
  %v215 = vmul.f32 %v155, 0.2
  %v216 = vmul.f32 %v160, 0.2
  %v217 = vmul.f32 %v163, 0.2
  %v218 = vmul.f32 %v168, 0.2
  %v219 = vmul.f32 %v171, 0.2
  %v220 = vmul.f32 %v176, 0.2
  %v221 = vmul.f32 %v179, 0.2
  %v222 = vmul.f32 %v184, 0.2
  %v223 = vmul.f32 %v187, 0.2
  %v224 = vmul.f32 %v192, 0.2
  %v225 = vmul.f32 %v195, 0.2
  %v226 = vmul.f32 %v200, 0.2
  %v227 = vmul.f32 %v203, 0.2
  %v228 = vmul.f32 %v208, 0.2
  %v229 = vmul.f32 %v211, 0.2
  %v230 = vmax.f32 %v152, %v214
  %v231 = vmax.f32 %v155, %v215
  %v232 = vmax.f32 %v160, %v216
  %v233 = vmax.f32 %v163, %v217
  %v234 = vmax.f32 %v168, %v218
  %v235 = vmax.f32 %v171, %v219
  %v236 = vmax.f32 %v176, %v220
  %v237 = vmax.f32 %v179, %v221
  %v238 = vmax.f32 %v184, %v222
  %v239 = vmax.f32 %v187, %v223
  %v240 = vmax.f32 %v192, %v224
  %v241 = vmax.f32 %v195, %v225
  %v242 = vmax.f32 %v200, %v226
  %v243 = vmax.f32 %v203, %v227
  %v244 = vmax.f32 %v208, %v228
  %v245 = vmax.f32 %v211, %v229
  %vm246 = vcmask 31744
  %v247 = vsel %vm246, %v230, 0.0
  %v248 = vsel %vm246, %v231, 0.0
  %v249 = vadd.f32 %v247, %v248
  %v250 = vsel %vm246, %v232, 0.0
  %v251 = vadd.f32 %v249, %v250
  %v252 = vsel %vm246, %v233, 0.0
  %v253 = vadd.f32 %v251, %v252
  %v254 = vsel %vm246, %v234, 0.0
  %v255 = vadd.f32 %v253, %v254
  %v256 = vsel %vm246, %v235, 0.0
  %v257 = vadd.f32 %v255, %v256
  %v258 = vsel %vm246, %v236, 0.0
  %v259 = vadd.f32 %v257, %v258
  %v260 = vsel %vm246, %v237, 0.0
  %v261 = vadd.f32 %v259, %v260
  %v262 = vsel %vm246, %v238, 0.0
  %v263 = vadd.f32 %v261, %v262
  %v264 = vsel %vm246, %v239, 0.0
  %v265 = vadd.f32 %v263, %v264
  %v266 = vsel %vm246, %v240, 0.0
  %v267 = vadd.f32 %v265, %v266
  %v268 = vsel %vm246, %v241, 0.0
  %v269 = vadd.f32 %v267, %v268
  %v270 = vsel %vm246, %v242, 0.0
  %v271 = vadd.f32 %v269, %v270
  %v272 = vsel %vm246, %v243, 0.0
  %v273 = vadd.f32 %v271, %v272
  %v274 = vsel %vm246, %v244, 0.0
  %v275 = vadd.f32 %v273, %v274
  %v276 = vsel %vm246, %v245, 0.0
  %v277 = vadd.f32 %v275, %v276
  %v278 = vrot.slane %v277, 4
  %v279 = vadd.f32 %v277, %v278
  %v280 = vrot.slane %v279, 2
  %v281 = vadd.f32 %v279, %v280
  %v282 = vrot.slane %v281, 1
  %v283 = vadd.f32 %v281, %v282
  %v284 = vmul.f32 %v230, %v230
  %v285 = vmul.f32 %v231, %v231
  %v286 = vmul.f32 %v232, %v232
  %v287 = vmul.f32 %v233, %v233
  %v288 = vmul.f32 %v234, %v234
  %v289 = vmul.f32 %v235, %v235
  %v290 = vmul.f32 %v236, %v236
  %v291 = vmul.f32 %v237, %v237
  %v292 = vmul.f32 %v238, %v238
  %v293 = vmul.f32 %v239, %v239
  %v294 = vmul.f32 %v240, %v240
  %v295 = vmul.f32 %v241, %v241
  %v296 = vmul.f32 %v242, %v242
  %v297 = vmul.f32 %v243, %v243
  %v298 = vmul.f32 %v244, %v244
  %v299 = vmul.f32 %v245, %v245
  %v300 = vsel %vm246, %v284, 0.0
  %v301 = vsel %vm246, %v285, 0.0
  %v302 = vadd.f32 %v300, %v301
  %v303 = vsel %vm246, %v286, 0.0
  %v304 = vadd.f32 %v302, %v303
  %v305 = vsel %vm246, %v287, 0.0
  %v306 = vadd.f32 %v304, %v305
  %v307 = vsel %vm246, %v288, 0.0
  %v308 = vadd.f32 %v306, %v307
  %v309 = vsel %vm246, %v289, 0.0
  %v310 = vadd.f32 %v308, %v309
  %v311 = vsel %vm246, %v290, 0.0
  %v312 = vadd.f32 %v310, %v311
  %v313 = vsel %vm246, %v291, 0.0
  %v314 = vadd.f32 %v312, %v313
  %v315 = vsel %vm246, %v292, 0.0
  %v316 = vadd.f32 %v314, %v315
  %v317 = vsel %vm246, %v293, 0.0
  %v318 = vadd.f32 %v316, %v317
  %v319 = vsel %vm246, %v294, 0.0
  %v320 = vadd.f32 %v318, %v319
  %v321 = vsel %vm246, %v295, 0.0
  %v322 = vadd.f32 %v320, %v321
  %v323 = vsel %vm246, %v296, 0.0
  %v324 = vadd.f32 %v322, %v323
  %v325 = vsel %vm246, %v297, 0.0
  %v326 = vadd.f32 %v324, %v325
  %v327 = vsel %vm246, %v298, 0.0
  %v328 = vadd.f32 %v326, %v327
  %v329 = vsel %vm246, %v299, 0.0
  %v330 = vadd.f32 %v328, %v329
  %v331 = vrot.slane %v330, 4
  %v332 = vadd.f32 %v330, %v331
  %v333 = vrot.slane %v332, 2
  %v334 = vadd.f32 %v332, %v333
  %v335 = vrot.slane %v334, 1
  %v336 = vadd.f32 %v334, %v335
  %v337 = vmul.f32 %v283, 0.0078125
  %v338 = vmul.f32 %v336, 0.0078125
  %v339 = vmul.f32 %v337, %v337
  %v340 = vsub.f32 %v338, %v339
  %v341 = vmax.f32 %v340, 0.0
  %v342 = vld [vmem:[%s3] sm:$0x1]
  %v343 = vadd.f32 %v341, 1e-05
  %v344 = vrsqrt.pop %v343
  %v345 = vmul.f32 %v342, %v344
  %v346 = vld [vmem:[%s4] sm:$0x1]
  %v347 = vmul.f32 %v337, %v345
  %v348 = vsub.f32 %v346, %v347
  %v350 = vlaneseq
  %v351 = vshrl.u32 %v350, 7
  %v352 = vsub.s32 0, %v351
  %v353 = vrot.slane %v345, %v352
  %v355 = vmul.f32 %v230, %v353
  %v356 = vmul.f32 %v231, %v353
  %v357 = vmul.f32 %v232, %v353
  %v358 = vmul.f32 %v233, %v353
  %v359 = vmul.f32 %v234, %v353
  %v360 = vmul.f32 %v235, %v353
  %v361 = vmul.f32 %v236, %v353
  %v362 = vmul.f32 %v237, %v353
  %v363 = vmul.f32 %v238, %v353
  %v364 = vmul.f32 %v239, %v353
  %v365 = vmul.f32 %v240, %v353
  %v366 = vmul.f32 %v241, %v353
  %v367 = vmul.f32 %v242, %v353
  %v368 = vmul.f32 %v243, %v353
  %v369 = vmul.f32 %v244, %v353
  %v370 = vmul.f32 %v245, %v353
  %v372 = vlaneseq
  %v373 = vshrl.u32 %v372, 7
  %v374 = vsub.s32 0, %v373
  %v375 = vrot.slane %v348, %v374
  %v377 = vadd.f32 %v355, %v375
  %v378 = vadd.f32 %v356, %v375
  %v379 = vadd.f32 %v357, %v375
  %v380 = vadd.f32 %v358, %v375
  %v381 = vadd.f32 %v359, %v375
  %v382 = vadd.f32 %v360, %v375
  %v383 = vadd.f32 %v361, %v375
  %v384 = vadd.f32 %v362, %v375
  %v385 = vadd.f32 %v363, %v375
  %v386 = vadd.f32 %v364, %v375
  %v387 = vadd.f32 %v365, %v375
  %v388 = vadd.f32 %v366, %v375
  %v389 = vadd.f32 %v367, %v375
  %v390 = vadd.f32 %v368, %v375
  %v391 = vadd.f32 %v369, %v375
  %v392 = vadd.f32 %v370, %v375
  %v393 = vpack.c.bf16 %v378, %v377
  %v394 = vpack.c.bf16 %v380, %v379
  %v395 = vpack.c.bf16 %v382, %v381
  %v396 = vpack.c.bf16 %v384, %v383
  %v397 = vpack.c.bf16 %v386, %v385
  %v398 = vpack.c.bf16 %v388, %v387
  %v399 = vpack.c.bf16 %v390, %v389
  %v400 = vpack.c.bf16 %v392, %v391
  %v409 = vunpack.c.l.b16 %v393
  %v410 = vunpack.c.h.b16 %v393
  %v411 = vunpack.c.l.b16 %v394
  %v412 = vunpack.c.h.b16 %v394
  %v413 = vunpack.c.l.b16 %v395
  %v414 = vunpack.c.h.b16 %v395
  %v415 = vunpack.c.l.b16 %v396
  %v416 = vunpack.c.h.b16 %v396
  %v417 = vunpack.c.l.b16 %v397
  %v418 = vunpack.c.h.b16 %v397
  %v419 = vunpack.c.l.b16 %v398
  %v420 = vunpack.c.h.b16 %v398
  %v421 = vunpack.c.l.b16 %v399
  %v422 = vunpack.c.h.b16 %v399
  %v423 = vunpack.c.l.b16 %v400
  %v424 = vunpack.c.h.b16 %v400
  %v425 = vpack.c.b16 %v409, %v409
  %v426 = vpack.c.b16 %v410, %v410
  %v427 = vpack.c.b16 %v411, %v411
  %v428 = vpack.c.b16 %v412, %v412
  %v429 = vpack.c.b16 %v413, %v413
  %v430 = vpack.c.b16 %v414, %v414
  %v431 = vpack.c.b16 %v415, %v415
  %v432 = vpack.c.b16 %v416, %v416
  %v433 = vpack.c.b16 %v417, %v417
  %v434 = vpack.c.b16 %v418, %v418
  %v435 = vpack.c.b16 %v419, %v419
  %v436 = vpack.c.b16 %v420, %v420
  %v437 = vpack.c.b16 %v421, %v421
  %v438 = vpack.c.b16 %v422, %v422
  %v439 = vpack.c.b16 %v423, %v423
  %v440 = vpack.c.b16 %v424, %v424
  %vm457 = vcmask 27648
  %458 = vst.msk [vmem:[%s5] sm:$0xf] %vm457, %v425
  %459 = vst.msk [vmem:[%s5 + $0x4] sm:$0xf] %vm457, %v426
  %460 = vst.msk [vmem:[%s5 + $0x8] sm:$0xf] %vm457, %v427
  %461 = vst.msk [vmem:[%s5 + $0xc] sm:$0xf] %vm457, %v428
  %462 = vst.msk [vmem:[%s5 + $0x10] sm:$0xf] %vm457, %v429
  %463 = vst.msk [vmem:[%s5 + $0x14] sm:$0xf] %vm457, %v430
  %464 = vst.msk [vmem:[%s5 + $0x18] sm:$0xf] %vm457, %v431
  %465 = vst.msk [vmem:[%s5 + $0x1c] sm:$0xf] %vm457, %v432
  %466 = vst.msk [vmem:[%s5 + $0x20] sm:$0xf] %vm457, %v433
  %467 = vst.msk [vmem:[%s5 + $0x24] sm:$0xf] %vm457, %v434
  %468 = vst.msk [vmem:[%s5 + $0x28] sm:$0xf] %vm457, %v435
  %469 = vst.msk [vmem:[%s5 + $0x2c] sm:$0xf] %vm457, %v436
  %470 = vst.msk [vmem:[%s5 + $0x30] sm:$0xf] %vm457, %v437
  %471 = vst.msk [vmem:[%s5 + $0x34] sm:$0xf] %vm457, %v438
  %472 = vst.msk [vmem:[%s5 + $0x38] sm:$0xf] %vm457, %v439
  %473 = vst.msk [vmem:[%s5 + $0x3c] sm:$0xf] %vm457, %v440
  // Predicated region
  $region22: #{encoder_forward.5} parent=0 // pred_check
    _
  $region23: #{encoder_forward.5} parent=0 // pred_check_branch
    %475 = sbr.rel (0) target = $region25
  $region24: #{encoder_forward.5} parent=0 // pred_region
    _
  $region25: #{encoder_forward.5} parent=0 // pred_fallthru
    _
  // Predicated region
  $region26: #{encoder_forward.5} parent=0 // pred_check
    _
  $region27: #{encoder_forward.5} parent=0 // pred_check_branch
    %477 = sbr.rel (0) target = $region29
  $region28: #{encoder_forward.5} parent=0 // pred_region
    _
  $region29: #{encoder_forward.5} parent=0 // pred_fallthru
    _

// kernel: encoder_forward.6
$region0: #{encoder_forward.6}
  #allocation0 [shape = 'u32[]', space=smem, size = 0x4, offset = 0x4, fixed_abs, tag = 'smem constant byte address 0x4 - core index']
  #allocation1 [shape = 'u32[144,128]{1,0:T(1,128)}', space=vmem, size = 0x12000, scoped, tag = 'internal scratch']
  %s0 = inlined_call_operand.vmem [shape: bf16[32,64], index: 0, kind: input, shape index: {}]
  %s1 = inlined_call_operand.vmem [shape: bf16[64,8], index: 1, kind: input, shape index: {}]
  %s2 = inlined_call_operand.vmem [shape: f32[1,8], index: 2, kind: input, shape index: {}]
  %s3 = inlined_call_operand.vmem [shape: f32[1,8], index: 3, kind: input, shape index: {}]
  %s4 = inlined_call_operand.vmem [shape: f32[1,8], index: 4, kind: input, shape index: {}]
  %s5 = inlined_call_operand.vmem [shape: bf16[32,8], index: 5, kind: output, shape index: {}]
  %s6 = sld [smem:[#allocation0]]
  $region30: #{encoder_forward.6} parent=0
    _
  %s8 = ssub.s32 1, %s6
  %s9 = scalar_select 0, %s8, %s6
  // Predicated region
  $region2: #{encoder_forward.6} parent=0 // pred_check
    _
  $region3: #{encoder_forward.6} parent=0 // pred_check_branch
    %11 = sbr.rel (0) target = $region5
  $region4: #{encoder_forward.6} parent=0 // pred_region
    _
  $region5: #{encoder_forward.6} parent=0 // pred_fallthru
    _
  // Predicated region
  $region6: #{encoder_forward.6} parent=0 // pred_check
    _
  $region7: #{encoder_forward.6} parent=0 // pred_check_branch
    %13 = sbr.rel (0) target = $region9
  $region8: #{encoder_forward.6} parent=0 // pred_region
    _
  $region9: #{encoder_forward.6} parent=0 // pred_fallthru
    _
  // Predicated region
  $region10: #{encoder_forward.6} parent=0 // pred_check
    _
  $region11: #{encoder_forward.6} parent=0 // pred_check_branch
    %15 = sbr.rel (0) target = $region13
  $region12: #{encoder_forward.6} parent=0 // pred_region
    _
  $region13: #{encoder_forward.6} parent=0 // pred_fallthru
    _
  // Predicated region
  $region14: #{encoder_forward.6} parent=0 // pred_check
    _
  $region15: #{encoder_forward.6} parent=0 // pred_check_branch
    %17 = sbr.rel (0) target = $region17
  $region16: #{encoder_forward.6} parent=0 // pred_region
    _
  $region17: #{encoder_forward.6} parent=0 // pred_fallthru
    _
  // Predicated region
  $region18: #{encoder_forward.6} parent=0 // pred_check
    _
  $region19: #{encoder_forward.6} parent=0 // pred_check_branch
    %19 = sbr.rel (0) target = $region21
  $region20: #{encoder_forward.6} parent=0 // pred_region
    _
  $region21: #{encoder_forward.6} parent=0 // pred_fallthru
    _
  %v21 = vld [vmem:[%s0] sm:$0xf]
  %v22 = vld [vmem:[%s0 + $0x4] sm:$0xf]
  %v23 = vld [vmem:[%s0 + $0x8] sm:$0xf]
  %v24 = vld [vmem:[%s0 + $0xc] sm:$0xf]
  %v25 = vld [vmem:[%s1] sm:$0xf]
  %v26 = vld [vmem:[%s1 + $0x4] sm:$0xf]
  %v27 = vld [vmem:[%s1 + $0x8] sm:$0xf]
  %v28 = vld [vmem:[%s1 + $0xc] sm:$0xf]
  %v29 = vld [vmem:[%s1 + $0x10] sm:$0xf]
  %v30 = vld [vmem:[%s1 + $0x14] sm:$0xf]
  %v31 = vld [vmem:[%s1 + $0x18] sm:$0xf]
  %v32 = vld [vmem:[%s1 + $0x1c] sm:$0xf]
  %v33 = vld [vmem:[%s2] sm:$0x1]
  %v35 = vlaneseq
  %v36 = vshrl.u32 %v35, 7
  %v37 = vsub.s32 0, %v36
  %v38 = vrot.slane %v33, %v37
  %v44 = vunpack.c.l.b16 %v21
  %v45 = vunpack.c.l.b16 %v22
  %v46 = vunpack.c.l.b16 %v23
  %v47 = vunpack.c.l.b16 %v24
  %v48 = vpack.c.b16 %v45, %v44
  %v49 = vpack.c.b16 %v47, %v46
  %v58 = vunpack.c.l.b16 %v25
  %v59 = vunpack.c.l.b16 %v26
  %v60 = vunpack.c.l.b16 %v27
  %v61 = vunpack.c.l.b16 %v28
  %v62 = vunpack.c.l.b16 %v29
  %v63 = vunpack.c.l.b16 %v30
  %v64 = vunpack.c.l.b16 %v31
  %v65 = vunpack.c.l.b16 %v32
  %v66 = vpack.c.b16 %v59, %v58
  %v67 = vpack.c.b16 %v61, %v60
  %v68 = vpack.c.b16 %v63, %v62
  %v69 = vpack.c.b16 %v65, %v64
  %vm74 = vcmask 523264
  %v76 = vsel %vm74, %v48, 0
  %v79 = vsel %vm74, %v49, 0
  %81 = vmatprep.subr.bf16.mxu0 0
  %82 = vmatpush1.bf16.msra.mxu0 %v66
  %83 = vmatprep.subr.bf16.mxu0 0
  %84 = vmatpush1.bf16.msra.mxu0 %v67
  %85 = vmatprep.subr.bf16.mxu0 0
  %86 = vmatpush1.bf16.msra.mxu0 %v68
  %87 = vmatprep.subr.bf16.mxu0 0
  %88 = vmatpush1.bf16.msra.mxu0 %v69
  %89 = vmatprep.subr.bf16.mxu0 0
  %90 = vmatpush1.bf16.msra.mxu0 0
  %91 = vmatprep.subr.bf16.mxu0 0
  %92 = vmatpush1.bf16.msra.mxu0 0
  %93 = vmatprep.subr.bf16.mxu0 0
  %94 = vmatpush1.bf16.msra.mxu0 0
  %95 = vmatprep.subr.bf16.mxu0 0
  %96 = vmatpush1.bf16.msra.mxu0 0
  %97 = vmatprep.subr.bf16.mxu0 0
  %98 = vmatpush1.bf16.msra.mxu0 0
  %99 = vmatprep.subr.bf16.mxu0 0
  %100 = vmatpush1.bf16.msra.mxu0 0
  %101 = vmatprep.subr.bf16.mxu0 0
  %102 = vmatpush1.bf16.msra.mxu0 0
  %103 = vmatprep.subr.bf16.mxu0 0
  %104 = vmatpush1.bf16.msra.mxu0 0
  %105 = vmatprep.subr.bf16.mxu0 0
  %106 = vmatpush1.bf16.msra.mxu0 0
  %107 = vmatprep.subr.bf16.mxu0 0
  %108 = vmatpush1.bf16.msra.mxu0 0
  %109 = vmatprep.subr.bf16.mxu0 0
  %110 = vmatpush1.bf16.msra.mxu0 0
  %111 = vmatprep.subr.bf16.mxu0 0
  %112 = vmatpush1.bf16.msra.mxu0 0
  %113 = vmatprep.mubr.bf16.mxu0 0
  %114 = vmatmul.mubr.bf16.gmra.mrb[0].mxu0 %v76
  %v115 = vpop.f32.mrb[0].mxu0
  %v116 = vadd.f32 %v38, %v115
  %v117 = vpop.f32.mrb[0].mxu0
  %v118 = vpop.f32.mrb[0].mxu0
  %v119 = vadd.f32 %v38, %v118
  %v120 = vpop.f32.mrb[0].mxu0
  %121 = vmatprep.mubr.bf16.mxu0 0
  %122 = vmatmul.mubr.bf16.gmra.mrb[0].mxu0 %v79
  %v123 = vpop.f32.mrb[0].mxu0
  %v124 = vadd.f32 %v38, %v123
  %v125 = vpop.f32.mrb[0].mxu0
  %v126 = vpop.f32.mrb[0].mxu0
  %v127 = vadd.f32 %v38, %v126
  %v128 = vpop.f32.mrb[0].mxu0
  %129 = vdwg.mxu0
  %v130 = vmul.f32 %v116, 0.2
  %v131 = vmul.f32 %v119, 0.2
  %v132 = vmul.f32 %v124, 0.2
  %v133 = vmul.f32 %v127, 0.2
  %v134 = vmax.f32 %v116, %v130
  %v135 = vmax.f32 %v119, %v131
  %v136 = vmax.f32 %v124, %v132
  %v137 = vmax.f32 %v127, %v133
  %vm138 = vcmask 64512
  %v139 = vsel %vm138, %v134, 0.0
  %v140 = vsel %vm138, %v135, 0.0
  %v141 = vadd.f32 %v139, %v140
  %v142 = vsel %vm138, %v136, 0.0
  %v143 = vadd.f32 %v141, %v142
  %v144 = vsel %vm138, %v137, 0.0
  %v145 = vadd.f32 %v143, %v144
  %v146 = vrot.slane %v145, 4
  %v147 = vadd.f32 %v145, %v146
  %v148 = vrot.slane %v147, 2
  %v149 = vadd.f32 %v147, %v148
  %v150 = vrot.slane %v149, 1
  %v151 = vadd.f32 %v149, %v150
  %v152 = vmul.f32 %v134, %v134
  %v153 = vmul.f32 %v135, %v135
  %v154 = vmul.f32 %v136, %v136
  %v155 = vmul.f32 %v137, %v137
  %v156 = vsel %vm138, %v152, 0.0
  %v157 = vsel %vm138, %v153, 0.0
  %v158 = vadd.f32 %v156, %v157
  %v159 = vsel %vm138, %v154, 0.0
  %v160 = vadd.f32 %v158, %v159
  %v161 = vsel %vm138, %v155, 0.0
  %v162 = vadd.f32 %v160, %v161
  %v163 = vrot.slane %v162, 4
  %v164 = vadd.f32 %v162, %v163
  %v165 = vrot.slane %v164, 2
  %v166 = vadd.f32 %v164, %v165
  %v167 = vrot.slane %v166, 1
  %v168 = vadd.f32 %v166, %v167
  %v169 = vmul.f32 %v151, 0.03125
  %v170 = vmul.f32 %v168, 0.03125
  %v171 = vmul.f32 %v169, %v169
  %v172 = vsub.f32 %v170, %v171
  %v173 = vmax.f32 %v172, 0.0
  %v174 = vld [vmem:[%s3] sm:$0x1]
  %v175 = vadd.f32 %v173, 1e-05
  %v176 = vrsqrt.pop %v175
  %v177 = vmul.f32 %v174, %v176
  %v178 = vld [vmem:[%s4] sm:$0x1]
  %v179 = vmul.f32 %v169, %v177
  %v180 = vsub.f32 %v178, %v179
  %v182 = vlaneseq
  %v183 = vshrl.u32 %v182, 7
  %v184 = vsub.s32 0, %v183
  %v185 = vrot.slane %v177, %v184
  %v187 = vmul.f32 %v134, %v185
  %v188 = vmul.f32 %v135, %v185
  %v189 = vmul.f32 %v136, %v185
  %v190 = vmul.f32 %v137, %v185
  %v192 = vlaneseq
  %v193 = vshrl.u32 %v192, 7
  %v194 = vsub.s32 0, %v193
  %v195 = vrot.slane %v180, %v194
  %v197 = vadd.f32 %v187, %v195
  %v198 = vadd.f32 %v188, %v195
  %v199 = vadd.f32 %v189, %v195
  %v200 = vadd.f32 %v190, %v195
  %v201 = vpack.c.bf16 %v198, %v197
  %v202 = vpack.c.bf16 %v200, %v199
  %v205 = vunpack.c.l.b16 %v201
  %v206 = vunpack.c.h.b16 %v201
  %v207 = vunpack.c.l.b16 %v202
  %v208 = vunpack.c.h.b16 %v202
  %v209 = vpack.c.b16 %v205, %v205
  %v210 = vpack.c.b16 %v206, %v206
  %v211 = vpack.c.b16 %v207, %v207
  %v212 = vpack.c.b16 %v208, %v208
  %vm217 = vcmask 60416
  %218 = vst.msk [vmem:[%s5] sm:$0xf] %vm217, %v209
  %219 = vst.msk [vmem:[%s5 + $0x4] sm:$0xf] %vm217, %v210
  %220 = vst.msk [vmem:[%s5 + $0x8] sm:$0xf] %vm217, %v211
  %221 = vst.msk [vmem:[%s5 + $0xc] sm:$0xf] %vm217, %v212
  // Predicated region
  $region22: #{encoder_forward.6} parent=0 // pred_check
    _
  $region23: #{encoder_forward.6} parent=0 // pred_check_branch
    %223 = sbr.rel (0) target = $region25
  $region24: #{encoder_forward.6} parent=0 // pred_region
    _
  $region25: #{encoder_forward.6} parent=0 // pred_fallthru
    _
  // Predicated region
  $region26: #{encoder_forward.6} parent=0 // pred_check
    _
  $region27: #{encoder_forward.6} parent=0 // pred_check_branch
    %225 = sbr.rel (0) target = $region29
  $region28: #{encoder_forward.6} parent=0 // pred_region
    _
  $region29: #{encoder_forward.6} parent=0 // pred_fallthru
    _

// kernel: tile.9
$region0: #{tile.9}
  %s0 = inlined_call_operand.vmem [shape: f32[2,4,2], index: 0, kind: input, shape index: {}]
  %s1 = inlined_call_operand.vmem [shape: f32[2,8], index: 1, kind: output, shape index: {}]
  $region1: #{tile.9} parent=0
    #allocation0 [shape = 'u8[4096]{0}', space=vmem, size = 0x1000, scoped, tag = 'scoped mem for output reshape']
    #allocation1 [shape = 'u8[8192]{0}', space=vmem, size = 0x2000, scoped, tag = 'scoped mem for input reshape']
    %s3 = sshllo.u32 0, 4
    %s4 = scalar_lea.vmem %s0, 4
    %v5 = vld [vmem:[%s4] sm:%s3]
    %s6 = scalar_lea.vmem [#allocation1], 8
    %7 = vst [vmem:[%s6] sm:%s3] %v5
    %v8 = vld [vmem:[%s0] sm:%s3]
    %9 = vst [vmem:[#allocation1] sm:%s3] %v8
    %s10 = smov 3
    %v11 = vld [vmem:[#allocation1] ss:$8 sm:%s10]
    %vm12 = vcmask 15360
    %13 = vst.msk [vmem:[#allocation0] sm:$0x3] %vm12, %v11
    %s14 = scalar_lea.vmem [#allocation1], 3
    %s15 = smov 3
    %v16 = vld [vmem:[%s14] ss:$8 sm:%s15]
    %17 = vrot.lane.b32.xlu0 %v16, 6
    %v18 = vpop.permute.xlu0 %17
    %vm19 = vcmask 64560
    %20 = vst.msk [vmem:[#allocation0] sm:$0x3] %vm19, %v18
    %s21 = scalar_lea.vmem [#allocation1], 2
    %s22 = smov 3
    %v23 = vld [vmem:[%s21] ss:$8 sm:%s22]
    %24 = vrot.lane.b32.xlu0 %v23, 4
    %v25 = vpop.permute.xlu0 %24
    %vm26 = vcmask 48160
    %27 = vst.msk [vmem:[#allocation0] sm:$0x3] %vm26, %v25
    %s28 = scalar_lea.vmem [#allocation1], 1
    %s29 = smov 3
    %v30 = vld [vmem:[%s28] ss:$8 sm:%s29]
    %31 = vrot.lane.b32.xlu0 %v30, 2
    %v32 = vpop.permute.xlu0 %31
    %vm33 = vcmask 31760
    %34 = vst.msk [vmem:[#allocation0] sm:$0x3] %vm33, %v32
    %s36 = sshllo.u32 0, 2
    %v38 = vld [vmem:[#allocation0] sm:%s36]
    %s39 = sshllo.u32 0, 2
    %40 = vst [vmem:[%s1] sm:%s39] %v38

// kernel: encoder_forward.7
$region0: #{encoder_forward.7}
  #allocation0 [shape = 'u32[]', space=smem, size = 0x4, offset = 0x4, fixed_abs, tag = 'smem constant byte address 0x4 - core index']
  #allocation1 [shape = 'u32[144,128]{1,0:T(1,128)}', space=vmem, size = 0x12000, scoped, tag = 'internal scratch']
  %s0 = inlined_call_operand.vmem [shape: bf16[8,128], index: 0, kind: input, shape index: {}]
  %s1 = inlined_call_operand.vmem [shape: bf16[128,16], index: 1, kind: input, shape index: {}]
  %s2 = inlined_call_operand.vmem [shape: f32[1,16], index: 2, kind: input, shape index: {}]
  %s3 = inlined_call_operand.vmem [shape: f32[1,16], index: 3, kind: input, shape index: {}]
  %s4 = inlined_call_operand.vmem [shape: f32[1,16], index: 4, kind: input, shape index: {}]
  %s5 = inlined_call_operand.vmem [shape: bf16[8,16], index: 5, kind: output, shape index: {}]
  %s6 = sld [smem:[#allocation0]]
  $region30: #{encoder_forward.7} parent=0
    _
  %s8 = ssub.s32 1, %s6
  %s9 = scalar_select 0, %s8, %s6
  // Predicated region
  $region2: #{encoder_forward.7} parent=0 // pred_check
    _
  $region3: #{encoder_forward.7} parent=0 // pred_check_branch
    %11 = sbr.rel (0) target = $region5
  $region4: #{encoder_forward.7} parent=0 // pred_region
    _
  $region5: #{encoder_forward.7} parent=0 // pred_fallthru
    _
  // Predicated region
  $region6: #{encoder_forward.7} parent=0 // pred_check
    _
  $region7: #{encoder_forward.7} parent=0 // pred_check_branch
    %13 = sbr.rel (0) target = $region9
  $region8: #{encoder_forward.7} parent=0 // pred_region
    _
  $region9: #{encoder_forward.7} parent=0 // pred_fallthru
    _
  // Predicated region
  $region10: #{encoder_forward.7} parent=0 // pred_check
    _
  $region11: #{encoder_forward.7} parent=0 // pred_check_branch
    %15 = sbr.rel (0) target = $region13
  $region12: #{encoder_forward.7} parent=0 // pred_region
    _
  $region13: #{encoder_forward.7} parent=0 // pred_fallthru
    _
  // Predicated region
  $region14: #{encoder_forward.7} parent=0 // pred_check
    _
  $region15: #{encoder_forward.7} parent=0 // pred_check_branch
    %17 = sbr.rel (0) target = $region17
  $region16: #{encoder_forward.7} parent=0 // pred_region
    _
  $region17: #{encoder_forward.7} parent=0 // pred_fallthru
    _
  // Predicated region
  $region18: #{encoder_forward.7} parent=0 // pred_check
    _
  $region19: #{encoder_forward.7} parent=0 // pred_check_branch
    %19 = sbr.rel (0) target = $region21
  $region20: #{encoder_forward.7} parent=0 // pred_region
    _
  $region21: #{encoder_forward.7} parent=0 // pred_fallthru
    _
  %v21 = vld [vmem:[%s0] sm:$0xf]
  %v22 = vld [vmem:[%s1] sm:$0xf]
  %v23 = vld [vmem:[%s1 + $0x4] sm:$0xf]
  %v24 = vld [vmem:[%s1 + $0x8] sm:$0xf]
  %v25 = vld [vmem:[%s1 + $0xc] sm:$0xf]
  %v26 = vld [vmem:[%s1 + $0x10] sm:$0xf]
  %v27 = vld [vmem:[%s1 + $0x14] sm:$0xf]
  %v28 = vld [vmem:[%s1 + $0x18] sm:$0xf]
  %v29 = vld [vmem:[%s1 + $0x1c] sm:$0xf]
  %v30 = vld [vmem:[%s1 + $0x20] sm:$0xf]
  %v31 = vld [vmem:[%s1 + $0x24] sm:$0xf]
  %v32 = vld [vmem:[%s1 + $0x28] sm:$0xf]
  %v33 = vld [vmem:[%s1 + $0x2c] sm:$0xf]
  %v34 = vld [vmem:[%s1 + $0x30] sm:$0xf]
  %v35 = vld [vmem:[%s1 + $0x34] sm:$0xf]
  %v36 = vld [vmem:[%s1 + $0x38] sm:$0xf]
  %v37 = vld [vmem:[%s1 + $0x3c] sm:$0xf]
  %v38 = vld [vmem:[%s2] sm:$0x1]
  %v40 = vlaneseq
  %v41 = vshrl.u32 %v40, 7
  %v42 = vsub.s32 0, %v41
  %v43 = vrot.slane %v38, %v42
  %v61 = vunpack.c.l.b16 %v22
  %v62 = vunpack.c.l.b16 %v23
  %v63 = vunpack.c.l.b16 %v24
  %v64 = vunpack.c.l.b16 %v25
  %v65 = vunpack.c.l.b16 %v26
  %v66 = vunpack.c.l.b16 %v27
  %v67 = vunpack.c.l.b16 %v28
  %v68 = vunpack.c.l.b16 %v29
  %v69 = vunpack.c.l.b16 %v30
  %v70 = vunpack.c.l.b16 %v31
  %v71 = vunpack.c.l.b16 %v32
  %v72 = vunpack.c.l.b16 %v33
  %v73 = vunpack.c.l.b16 %v34
  %v74 = vunpack.c.l.b16 %v35
  %v75 = vunpack.c.l.b16 %v36
  %v76 = vunpack.c.l.b16 %v37
  %v77 = vpack.c.b16 %v62, %v61
  %v78 = vpack.c.b16 %v64, %v63
  %v79 = vpack.c.b16 %v66, %v65
  %v80 = vpack.c.b16 %v68, %v67
  %v81 = vpack.c.b16 %v70, %v69
  %v82 = vpack.c.b16 %v72, %v71
  %v83 = vpack.c.b16 %v74, %v73
  %v84 = vpack.c.b16 %v76, %v75
  %93 = vmatprep.subr.bf16.mxu0 0
  %94 = vmatpush1.bf16.msra.mxu0 %v77
  %95 = vmatprep.subr.bf16.mxu0 0
  %96 = vmatpush1.bf16.msra.mxu0 %v78
  %97 = vmatprep.subr.bf16.mxu0 0
  %98 = vmatpush1.bf16.msra.mxu0 %v79
  %99 = vmatprep.subr.bf16.mxu0 0
  %100 = vmatpush1.bf16.msra.mxu0 %v80
  %101 = vmatprep.subr.bf16.mxu0 0
  %102 = vmatpush1.bf16.msra.mxu0 %v81
  %103 = vmatprep.subr.bf16.mxu0 0
  %104 = vmatpush1.bf16.msra.mxu0 %v82
  %105 = vmatprep.subr.bf16.mxu0 0
  %106 = vmatpush1.bf16.msra.mxu0 %v83
  %107 = vmatprep.subr.bf16.mxu0 0
  %108 = vmatpush1.bf16.msra.mxu0 %v84
  %109 = vmatprep.subr.bf16.mxu0 0
  %110 = vmatpush1.bf16.msra.mxu0 0
  %111 = vmatprep.subr.bf16.mxu0 0
  %112 = vmatpush1.bf16.msra.mxu0 0
  %113 = vmatprep.subr.bf16.mxu0 0
  %114 = vmatpush1.bf16.msra.mxu0 0
  %115 = vmatprep.subr.bf16.mxu0 0
  %116 = vmatpush1.bf16.msra.mxu0 0
  %117 = vmatprep.subr.bf16.mxu0 0
  %118 = vmatpush1.bf16.msra.mxu0 0
  %119 = vmatprep.subr.bf16.mxu0 0
  %120 = vmatpush1.bf16.msra.mxu0 0
  %121 = vmatprep.subr.bf16.mxu0 0
  %122 = vmatpush1.bf16.msra.mxu0 0
  %123 = vmatprep.subr.bf16.mxu0 0
  %124 = vmatpush1.bf16.msra.mxu0 0
  %125 = vmatprep.mubr.bf16.mxu0 0
  %126 = vmatmul.mubr.bf16.gmra.mrb[0].mxu0 %v21
  %v127 = vpop.f32.mrb[0].mxu0
  %v128 = vadd.f32 %v43, %v127
  %v129 = vpop.f32.mrb[0].mxu0
  %v130 = vpop.f32.mrb[0].mxu0
  %v131 = vpop.f32.mrb[0].mxu0
  %132 = vdwg.mxu0
  %v133 = vmul.f32 %v128, 0.2
  %v134 = vmax.f32 %v128, %v133
  %vm135 = vcmask 130048
  %v136 = vsel %vm135, %v134, 0.0
  %v137 = vrot.slane %v136, 4
  %v138 = vadd.f32 %v136, %v137
  %v139 = vrot.slane %v138, 2
  %v140 = vadd.f32 %v138, %v139
  %v141 = vrot.slane %v140, 1
  %v142 = vadd.f32 %v140, %v141
  %v143 = vmul.f32 %v134, %v134
  %v144 = vsel %vm135, %v143, 0.0
  %v145 = vrot.slane %v144, 4
  %v146 = vadd.f32 %v144, %v145
  %v147 = vrot.slane %v146, 2
  %v148 = vadd.f32 %v146, %v147
  %v149 = vrot.slane %v148, 1
  %v150 = vadd.f32 %v148, %v149
  %v151 = vmul.f32 %v142, 0.125
  %v152 = vmul.f32 %v150, 0.125
  %v153 = vmul.f32 %v151, %v151
  %v154 = vsub.f32 %v152, %v153
  %v155 = vmax.f32 %v154, 0.0
  %v156 = vld [vmem:[%s3] sm:$0x1]
  %v157 = vadd.f32 %v155, 1e-05
  %v158 = vrsqrt.pop %v157
  %v159 = vmul.f32 %v156, %v158
  %v160 = vld [vmem:[%s4] sm:$0x1]
  %v161 = vmul.f32 %v151, %v159
  %v162 = vsub.f32 %v160, %v161
  %v164 = vlaneseq
  %v165 = vshrl.u32 %v164, 7
  %v166 = vsub.s32 0, %v165
  %v167 = vrot.slane %v159, %v166
  %v169 = vmul.f32 %v134, %v167
  %v171 = vlaneseq
  %v172 = vshrl.u32 %v171, 7
  %v173 = vsub.s32 0, %v172
  %v174 = vrot.slane %v162, %v173
  %v176 = vadd.f32 %v169, %v174
  %v177 = vpack.c.bf16 %v176, %v176
  %vm178 = vcmask 125952
  %179 = vst.msk [vmem:[%s5] sm:$0xf] %vm178, %v177
  // Predicated region
  $region22: #{encoder_forward.7} parent=0 // pred_check
    _
  $region23: #{encoder_forward.7} parent=0 // pred_check_branch
    %181 = sbr.rel (0) target = $region25
  $region24: #{encoder_forward.7} parent=0 // pred_region
    _
  $region25: #{encoder_forward.7} parent=0 // pred_fallthru
    _
  // Predicated region
  $region26: #{encoder_forward.7} parent=0 // pred_check
    _
  $region27: #{encoder_forward.7} parent=0 // pred_check_branch
    %183 = sbr.rel (0) target = $region29
  $region28: #{encoder_forward.7} parent=0 // pred_region
    _
  $region29: #{encoder_forward.7} parent=0 // pred_fallthru
    _

// kernel: encoder_forward.8
$region0: #{encoder_forward.8}
  #allocation0 [shape = 'u32[]', space=smem, size = 0x4, offset = 0x4, fixed_abs, tag = 'smem constant byte address 0x4 - core index']
  #allocation1 [shape = 'u32[144,128]{1,0:T(1,128)}', space=vmem, size = 0x12000, scoped, tag = 'internal scratch']
  %s0 = inlined_call_operand.vmem [shape: bf16[2,256], index: 0, kind: input, shape index: {}]
  %s1 = inlined_call_operand.vmem [shape: bf16[256,32], index: 1, kind: input, shape index: {}]
  %s2 = inlined_call_operand.vmem [shape: f32[1,32], index: 2, kind: input, shape index: {}]
  %s3 = inlined_call_operand.vmem [shape: f32[1,32], index: 3, kind: input, shape index: {}]
  %s4 = inlined_call_operand.vmem [shape: f32[1,32], index: 4, kind: input, shape index: {}]
  %s5 = inlined_call_operand.vmem [shape: bf16[2,32], index: 5, kind: output, shape index: {}]
  %s6 = sld [smem:[#allocation0]]
  $region30: #{encoder_forward.8} parent=0
    _
  %s8 = ssub.s32 1, %s6
  %s9 = scalar_select 0, %s8, %s6
  // Predicated region
  $region2: #{encoder_forward.8} parent=0 // pred_check
    _
  $region3: #{encoder_forward.8} parent=0 // pred_check_branch
    %11 = sbr.rel (0) target = $region5
  $region4: #{encoder_forward.8} parent=0 // pred_region
    _
  $region5: #{encoder_forward.8} parent=0 // pred_fallthru
    _
  // Predicated region
  $region6: #{encoder_forward.8} parent=0 // pred_check
    _
  $region7: #{encoder_forward.8} parent=0 // pred_check_branch
    %13 = sbr.rel (0) target = $region9
  $region8: #{encoder_forward.8} parent=0 // pred_region
    _
  $region9: #{encoder_forward.8} parent=0 // pred_fallthru
    _
  // Predicated region
  $region10: #{encoder_forward.8} parent=0 // pred_check
    _
  $region11: #{encoder_forward.8} parent=0 // pred_check_branch
    %15 = sbr.rel (0) target = $region13
  $region12: #{encoder_forward.8} parent=0 // pred_region
    _
  $region13: #{encoder_forward.8} parent=0 // pred_fallthru
    _
  // Predicated region
  $region14: #{encoder_forward.8} parent=0 // pred_check
    _
  $region15: #{encoder_forward.8} parent=0 // pred_check_branch
    %17 = sbr.rel (0) target = $region17
  $region16: #{encoder_forward.8} parent=0 // pred_region
    _
  $region17: #{encoder_forward.8} parent=0 // pred_fallthru
    _
  // Predicated region
  $region18: #{encoder_forward.8} parent=0 // pred_check
    _
  $region19: #{encoder_forward.8} parent=0 // pred_check_branch
    %19 = sbr.rel (0) target = $region21
  $region20: #{encoder_forward.8} parent=0 // pred_region
    _
  $region21: #{encoder_forward.8} parent=0 // pred_fallthru
    _
  %v21 = vld [vmem:[%s0] sm:$0x3]
  %v22 = vld [vmem:[%s1] sm:$0xf]
  %v23 = vld [vmem:[%s1 + $0x4] sm:$0xf]
  %v24 = vld [vmem:[%s1 + $0x8] sm:$0xf]
  %v25 = vld [vmem:[%s1 + $0xc] sm:$0xf]
  %v26 = vld [vmem:[%s1 + $0x10] sm:$0xf]
  %v27 = vld [vmem:[%s1 + $0x14] sm:$0xf]
  %v28 = vld [vmem:[%s1 + $0x18] sm:$0xf]
  %v29 = vld [vmem:[%s1 + $0x1c] sm:$0xf]
  %v30 = vld [vmem:[%s1 + $0x20] sm:$0xf]
  %v31 = vld [vmem:[%s1 + $0x24] sm:$0xf]
  %v32 = vld [vmem:[%s1 + $0x28] sm:$0xf]
  %v33 = vld [vmem:[%s1 + $0x2c] sm:$0xf]
  %v34 = vld [vmem:[%s1 + $0x30] sm:$0xf]
  %v35 = vld [vmem:[%s1 + $0x34] sm:$0xf]
  %v36 = vld [vmem:[%s1 + $0x38] sm:$0xf]
  %v37 = vld [vmem:[%s1 + $0x3c] sm:$0xf]
  %v38 = vld [vmem:[%s1 + $0x40] sm:$0xf]
  %v39 = vld [vmem:[%s1 + $0x44] sm:$0xf]
  %v40 = vld [vmem:[%s1 + $0x48] sm:$0xf]
  %v41 = vld [vmem:[%s1 + $0x4c] sm:$0xf]
  %v42 = vld [vmem:[%s1 + $0x50] sm:$0xf]
  %v43 = vld [vmem:[%s1 + $0x54] sm:$0xf]
  %v44 = vld [vmem:[%s1 + $0x58] sm:$0xf]
  %v45 = vld [vmem:[%s1 + $0x5c] sm:$0xf]
  %v46 = vld [vmem:[%s1 + $0x60] sm:$0xf]
  %v47 = vld [vmem:[%s1 + $0x64] sm:$0xf]
  %v48 = vld [vmem:[%s1 + $0x68] sm:$0xf]
  %v49 = vld [vmem:[%s1 + $0x6c] sm:$0xf]
  %v50 = vld [vmem:[%s1 + $0x70] sm:$0xf]
  %v51 = vld [vmem:[%s1 + $0x74] sm:$0xf]
  %v52 = vld [vmem:[%s1 + $0x78] sm:$0xf]
  %v53 = vld [vmem:[%s1 + $0x7c] sm:$0xf]
  %v54 = vld [vmem:[%s2] sm:$0x1]
  %v56 = vlaneseq
  %v57 = vshrl.u32 %v56, 7
  %v58 = vsub.s32 0, %v57
  %v59 = vrot.slane %v54, %v58
  %v63 = vunpack.c.l.s4 1966171168
  %v64 = vunpack.c.0.s8 %v63
  %v65 = vlaneseq
  %v66 = vshrl.u32 %v65, 7
  %v67 = vsub.s32 %v64, %v66
  %v68 = vrot.slane %v21, %v67
  %v69 = vcombine.high %v68, %v68
  %v71 = vunpack.c.l.s4 1966171168
  %v72 = vunpack.c.0.s8 %v71
  %v73 = vlaneseq
  %v74 = vshrl.u32 %v73, 7
  %v75 = vsub.s32 %v72, %v74
  %v76 = vrot.slane %v68, %v75
  %v78 = vunpack.c.l.s4 1966171168
  %v79 = vunpack.c.0.s8 %v78
  %v80 = vlaneseq
  %v81 = vshrl.u32 %v80, 7
  %v82 = vsub.s32 %v79, %v81
  %v83 = vrot.slane %v69, %v82
  %v118 = vunpack.c.l.b16 %v22
  %v119 = vunpack.c.l.b16 %v23
  %v120 = vunpack.c.l.b16 %v24
  %v121 = vunpack.c.l.b16 %v25
  %v122 = vunpack.c.l.b16 %v26
  %v123 = vunpack.c.l.b16 %v27
  %v124 = vunpack.c.l.b16 %v28
  %v125 = vunpack.c.l.b16 %v29
  %v126 = vunpack.c.l.b16 %v30
  %v127 = vunpack.c.l.b16 %v31
  %v128 = vunpack.c.l.b16 %v32
  %v129 = vunpack.c.l.b16 %v33
  %v130 = vunpack.c.l.b16 %v34
  %v131 = vunpack.c.l.b16 %v35
  %v132 = vunpack.c.l.b16 %v36
  %v133 = vunpack.c.l.b16 %v37
  %v134 = vunpack.c.l.b16 %v38
  %v135 = vunpack.c.l.b16 %v39
  %v136 = vunpack.c.l.b16 %v40
  %v137 = vunpack.c.l.b16 %v41
  %v138 = vunpack.c.l.b16 %v42
  %v139 = vunpack.c.l.b16 %v43
  %v140 = vunpack.c.l.b16 %v44
  %v141 = vunpack.c.l.b16 %v45
  %v142 = vunpack.c.l.b16 %v46
  %v143 = vunpack.c.l.b16 %v47
  %v144 = vunpack.c.l.b16 %v48
  %v145 = vunpack.c.l.b16 %v49
  %v146 = vunpack.c.l.b16 %v50
  %v147 = vunpack.c.l.b16 %v51
  %v148 = vunpack.c.l.b16 %v52
  %v149 = vunpack.c.l.b16 %v53
  %v150 = vpack.c.b16 %v119, %v118
  %v151 = vpack.c.b16 %v121, %v120
  %v152 = vpack.c.b16 %v123, %v122
  %v153 = vpack.c.b16 %v125, %v124
  %v154 = vpack.c.b16 %v127, %v126
  %v155 = vpack.c.b16 %v129, %v128
  %v156 = vpack.c.b16 %v131, %v130
  %v157 = vpack.c.b16 %v133, %v132
  %v158 = vpack.c.b16 %v135, %v134
  %v159 = vpack.c.b16 %v137, %v136
  %v160 = vpack.c.b16 %v139, %v138
  %v161 = vpack.c.b16 %v141, %v140
  %v162 = vpack.c.b16 %v143, %v142
  %v163 = vpack.c.b16 %v145, %v144
  %v164 = vpack.c.b16 %v147, %v146
  %v165 = vpack.c.b16 %v149, %v148
  %182 = vmatprep.subr.bf16.mxu0 0
  %183 = vmatpush1.bf16.msra.mxu0 %v150
  %184 = vmatprep.subr.bf16.mxu0 0
  %185 = vmatpush1.bf16.msra.mxu0 %v151
  %186 = vmatprep.subr.bf16.mxu0 0
  %187 = vmatpush1.bf16.msra.mxu0 %v152
  %188 = vmatprep.subr.bf16.mxu0 0
  %189 = vmatpush1.bf16.msra.mxu0 %v153
  %190 = vmatprep.subr.bf16.mxu0 0
  %191 = vmatpush1.bf16.msra.mxu0 %v154
  %192 = vmatprep.subr.bf16.mxu0 0
  %193 = vmatpush1.bf16.msra.mxu0 %v155
  %194 = vmatprep.subr.bf16.mxu0 0
  %195 = vmatpush1.bf16.msra.mxu0 %v156
  %196 = vmatprep.subr.bf16.mxu0 0
  %197 = vmatpush1.bf16.msra.mxu0 %v157
  %198 = vmatprep.subr.bf16.mxu0 0
  %199 = vmatpush1.bf16.msra.mxu0 %v158
  %200 = vmatprep.subr.bf16.mxu0 0
  %201 = vmatpush1.bf16.msra.mxu0 %v159
  %202 = vmatprep.subr.bf16.mxu0 0
  %203 = vmatpush1.bf16.msra.mxu0 %v160
  %204 = vmatprep.subr.bf16.mxu0 0
  %205 = vmatpush1.bf16.msra.mxu0 %v161
  %206 = vmatprep.subr.bf16.mxu0 0
  %207 = vmatpush1.bf16.msra.mxu0 %v162
  %208 = vmatprep.subr.bf16.mxu0 0
  %209 = vmatpush1.bf16.msra.mxu0 %v163
  %210 = vmatprep.subr.bf16.mxu0 0
  %211 = vmatpush1.bf16.msra.mxu0 %v164
  %212 = vmatprep.subr.bf16.mxu0 0
  %213 = vmatpush1.bf16.msra.mxu0 %v165
  %214 = vmatprep.mubr.bf16.mxu0 %v83
  %215 = vmatmul.mubr.bf16.gmra.mrb[0].mxu0 %v76
  %v216 = vpop.f32.mrb[0].mxu0
  %v217 = vadd.f32 %v59, %v216
  %v218 = vpop.f32.mrb[0].mxu0
  %v219 = vpop.f32.mrb[0].mxu0
  %v220 = vpop.f32.mrb[0].mxu0
  %221 = vdwg.mxu0
  %v222 = vmul.f32 %v217, 0.2
  %v223 = vmax.f32 %v217, %v222
  %vm224 = vcmask 254976
  %v225 = vsel %vm224, %v223, 0.0
  %v226 = vrot.slane %v225, 4
  %v227 = vadd.f32 %v225, %v226
  %v228 = vrot.slane %v227, 2
  %v229 = vadd.f32 %v227, %v228
  %v230 = vrot.slane %v229, 1
  %v231 = vadd.f32 %v229, %v230
  %v232 = vmul.f32 %v223, %v223
  %v233 = vsel %vm224, %v232, 0.0
  %v234 = vrot.slane %v233, 4
  %v235 = vadd.f32 %v233, %v234
  %v236 = vrot.slane %v235, 2
  %v237 = vadd.f32 %v235, %v236
  %v238 = vrot.slane %v237, 1
  %v239 = vadd.f32 %v237, %v238
  %v240 = vmul.f32 %v231, 0.5
  %v241 = vmul.f32 %v239, 0.5
  %v242 = vmul.f32 %v240, %v240
  %v243 = vsub.f32 %v241, %v242
  %v244 = vmax.f32 %v243, 0.0
  %v245 = vld [vmem:[%s3] sm:$0x1]
  %v246 = vadd.f32 %v244, 1e-05
  %v247 = vrsqrt.pop %v246
  %v248 = vmul.f32 %v245, %v247
  %v249 = vld [vmem:[%s4] sm:$0x1]
  %v250 = vmul.f32 %v240, %v248
  %v251 = vsub.f32 %v249, %v250
  %v253 = vlaneseq
  %v254 = vshrl.u32 %v253, 7
  %v255 = vsub.s32 0, %v254
  %v256 = vrot.slane %v248, %v255
  %v258 = vmul.f32 %v223, %v256
  %v260 = vlaneseq
  %v261 = vshrl.u32 %v260, 7
  %v262 = vsub.s32 0, %v261
  %v263 = vrot.slane %v251, %v262
  %v265 = vadd.f32 %v258, %v263
  %v266 = vpack.c.bf16 %v265, %v265
  %vm267 = vcmask 253952
  %268 = vst.msk [vmem:[%s5] sm:$0x1] %vm267, %v266
  // Predicated region
  $region22: #{encoder_forward.8} parent=0 // pred_check
    _
  $region23: #{encoder_forward.8} parent=0 // pred_check_branch
    %270 = sbr.rel (0) target = $region25
  $region24: #{encoder_forward.8} parent=0 // pred_region
    _
  $region25: #{encoder_forward.8} parent=0 // pred_fallthru
    _
  // Predicated region
  $region26: #{encoder_forward.8} parent=0 // pred_check
    _
  $region27: #{encoder_forward.8} parent=0 // pred_check_branch
    %272 = sbr.rel (0) target = $region29
  $region28: #{encoder_forward.8} parent=0 // pred_region
    _
  $region29: #{encoder_forward.8} parent=0 // pred_fallthru
    _

// kernel: encoder_forward.9
$region0: #{encoder_forward.9}
  #allocation0 [shape = 'u32[]', space=smem, size = 0x4, offset = 0x4, fixed_abs, tag = 'smem constant byte address 0x4 - core index']
  #allocation1 [shape = 'u32[144,128]{1,0:T(1,128)}', space=vmem, size = 0x12000, scoped, tag = 'internal scratch']
  %s0 = inlined_call_operand.vmem [shape: bf16[2,32], index: 0, kind: input, shape index: {}]
  %s1 = inlined_call_operand.vmem [shape: bf16[32,16], index: 1, kind: input, shape index: {}]
  %s2 = inlined_call_operand.vmem [shape: f32[1,16], index: 2, kind: input, shape index: {}]
  %s3 = inlined_call_operand.vmem [shape: bf16[8,8], index: 3, kind: input, shape index: {}]
  %s4 = inlined_call_operand.vmem [shape: bf16[8,128], index: 4, kind: input, shape index: {}]
  %s5 = inlined_call_operand.vmem [shape: f32[1,128], index: 5, kind: input, shape index: {}]
  %s6 = inlined_call_operand.vmem [shape: bf16[128,128], index: 6, kind: input, shape index: {}]
  %s7 = inlined_call_operand.vmem [shape: f32[1,128], index: 7, kind: input, shape index: {}]
  %s8 = inlined_call_operand.vmem [shape: bf16[128,8], index: 8, kind: input, shape index: {}]
  %s9 = inlined_call_operand.vmem [shape: f32[1,8], index: 9, kind: input, shape index: {}]
  %s10 = inlined_call_operand.vmem [shape: f32[2,8], index: 10, kind: input, shape index: {}]
  %s11 = inlined_call_operand.vmem [shape: f32[8,2], index: 11, kind: input, shape index: {}]
  %s12 = inlined_call_operand.vmem [shape: f32[3,2,8], index: 12, kind: output, shape index: {}]
  %s13 = sld [smem:[#allocation0]]
  $region58: #{encoder_forward.9} parent=0
    _
  %s15 = ssub.s32 1, %s13
  %s16 = scalar_select 0, %s15, %s13
  // Predicated region
  $region2: #{encoder_forward.9} parent=0 // pred_check
    _
  $region3: #{encoder_forward.9} parent=0 // pred_check_branch
    %18 = sbr.rel (0) target = $region5
  $region4: #{encoder_forward.9} parent=0 // pred_region
    _
  $region5: #{encoder_forward.9} parent=0 // pred_fallthru
    _
  // Predicated region
  $region6: #{encoder_forward.9} parent=0 // pred_check
    _
  $region7: #{encoder_forward.9} parent=0 // pred_check_branch
    %20 = sbr.rel (0) target = $region9
  $region8: #{encoder_forward.9} parent=0 // pred_region
    _
  $region9: #{encoder_forward.9} parent=0 // pred_fallthru
    _
  // Predicated region
  $region10: #{encoder_forward.9} parent=0 // pred_check
    _
  $region11: #{encoder_forward.9} parent=0 // pred_check_branch
    %22 = sbr.rel (0) target = $region13
  $region12: #{encoder_forward.9} parent=0 // pred_region
    _
  $region13: #{encoder_forward.9} parent=0 // pred_fallthru
    _
  // Predicated region
  $region14: #{encoder_forward.9} parent=0 // pred_check
    _
  $region15: #{encoder_forward.9} parent=0 // pred_check_branch
    %24 = sbr.rel (0) target = $region17
  $region16: #{encoder_forward.9} parent=0 // pred_region
    _
  $region17: #{encoder_forward.9} parent=0 // pred_fallthru
    _
  // Predicated region
  $region18: #{encoder_forward.9} parent=0 // pred_check
    _
  $region19: #{encoder_forward.9} parent=0 // pred_check_branch
    %26 = sbr.rel (0) target = $region21
  $region20: #{encoder_forward.9} parent=0 // pred_region
    _
  $region21: #{encoder_forward.9} parent=0 // pred_fallthru
    _
  // Predicated region
  $region22: #{encoder_forward.9} parent=0 // pred_check
    _
  $region23: #{encoder_forward.9} parent=0 // pred_check_branch
    %28 = sbr.rel (0) target = $region25
  $region24: #{encoder_forward.9} parent=0 // pred_region
    _
  $region25: #{encoder_forward.9} parent=0 // pred_fallthru
    _
  // Predicated region
  $region26: #{encoder_forward.9} parent=0 // pred_check
    _
  $region27: #{encoder_forward.9} parent=0 // pred_check_branch
    %30 = sbr.rel (0) target = $region29
  $region28: #{encoder_forward.9} parent=0 // pred_region
    _
  $region29: #{encoder_forward.9} parent=0 // pred_fallthru
    _
  // Predicated region
  $region30: #{encoder_forward.9} parent=0 // pred_check
    _
  $region31: #{encoder_forward.9} parent=0 // pred_check_branch
    %32 = sbr.rel (0) target = $region33
  $region32: #{encoder_forward.9} parent=0 // pred_region
    _
  $region33: #{encoder_forward.9} parent=0 // pred_fallthru
    _
  // Predicated region
  $region34: #{encoder_forward.9} parent=0 // pred_check
    _
  $region35: #{encoder_forward.9} parent=0 // pred_check_branch
    %34 = sbr.rel (0) target = $region37
  $region36: #{encoder_forward.9} parent=0 // pred_region
    _
  $region37: #{encoder_forward.9} parent=0 // pred_fallthru
    _
  // Predicated region
  $region38: #{encoder_forward.9} parent=0 // pred_check
    _
  $region39: #{encoder_forward.9} parent=0 // pred_check_branch
    %36 = sbr.rel (0) target = $region41
  $region40: #{encoder_forward.9} parent=0 // pred_region
    _
  $region41: #{encoder_forward.9} parent=0 // pred_fallthru
    _
  // Predicated region
  $region42: #{encoder_forward.9} parent=0 // pred_check
    _
  $region43: #{encoder_forward.9} parent=0 // pred_check_branch
    %38 = sbr.rel (0) target = $region45
  $region44: #{encoder_forward.9} parent=0 // pred_region
    _
  $region45: #{encoder_forward.9} parent=0 // pred_fallthru
    _
  // Predicated region
  $region46: #{encoder_forward.9} parent=0 // pred_check
    _
  $region47: #{encoder_forward.9} parent=0 // pred_check_branch
    %40 = sbr.rel (0) target = $region49
  $region48: #{encoder_forward.9} parent=0 // pred_region
    _
  $region49: #{encoder_forward.9} parent=0 // pred_fallthru
    _
  %v42 = vld [vmem:[%s0] sm:$0x1]
  %v43 = vld [vmem:[%s1] sm:$0xf]
  %v44 = vld [vmem:[%s1 + $0x4] sm:$0xf]
  %v45 = vld [vmem:[%s1 + $0x8] sm:$0xf]
  %v46 = vld [vmem:[%s1 + $0xc] sm:$0xf]
  %v47 = vld [vmem:[%s2] sm:$0x1]
  %v49 = vlaneseq
  %v50 = vshrl.u32 %v49, 7
  %v51 = vsub.s32 0, %v50
  %v52 = vrot.slane %v47, %v51
  %v58 = vunpack.c.l.b16 %v43
  %v59 = vunpack.c.l.b16 %v44
  %v60 = vunpack.c.l.b16 %v45
  %v61 = vunpack.c.l.b16 %v46
  %v62 = vpack.c.b16 %v59, %v58
  %v63 = vpack.c.b16 %v61, %v60
  %vm66 = vcmask 261120
  %v68 = vsel %vm66, %v42, 0
  %70 = vmatprep.subr.bf16.mxu0 0
  %71 = vmatpush1.bf16.msra.mxu0 %v62
  %72 = vmatprep.subr.bf16.mxu0 0
  %73 = vmatpush1.bf16.msra.mxu0 %v63
  %74 = vmatprep.subr.bf16.mxu0 0
  %75 = vmatpush1.bf16.msra.mxu0 0
  %76 = vmatprep.subr.bf16.mxu0 0
  %77 = vmatpush1.bf16.msra.mxu0 0
  %78 = vmatprep.subr.bf16.mxu0 0
  %79 = vmatpush1.bf16.msra.mxu0 0
  %80 = vmatprep.subr.bf16.mxu0 0
  %81 = vmatpush1.bf16.msra.mxu0 0
  %82 = vmatprep.subr.bf16.mxu0 0
  %83 = vmatpush1.bf16.msra.mxu0 0
  %84 = vmatprep.subr.bf16.mxu0 0
  %85 = vmatpush1.bf16.msra.mxu0 0
  %86 = vmatprep.subr.bf16.mxu0 0
  %87 = vmatpush1.bf16.msra.mxu0 0
  %88 = vmatprep.subr.bf16.mxu0 0
  %89 = vmatpush1.bf16.msra.mxu0 0
  %90 = vmatprep.subr.bf16.mxu0 0
  %91 = vmatpush1.bf16.msra.mxu0 0
  %92 = vmatprep.subr.bf16.mxu0 0
  %93 = vmatpush1.bf16.msra.mxu0 0
  %94 = vmatprep.subr.bf16.mxu0 0
  %95 = vmatpush1.bf16.msra.mxu0 0
  %96 = vmatprep.subr.bf16.mxu0 0
  %97 = vmatpush1.bf16.msra.mxu0 0
  %98 = vmatprep.subr.bf16.mxu0 0
  %99 = vmatpush1.bf16.msra.mxu0 0
  %100 = vmatprep.subr.bf16.mxu0 0
  %101 = vmatpush1.bf16.msra.mxu0 0
  %102 = vmatprep.mubr.bf16.mxu0 0
  %103 = vmatmul.mubr.bf16.gmra.mrb[0].mxu0 %v68
  %v104 = vpop.f32.mrb[0].mxu0
  %v105 = vadd.f32 %v52, %v104
  %v106 = vpop.f32.mrb[0].mxu0
  %v107 = vpop.f32.mrb[0].mxu0
  %v108 = vpop.f32.mrb[0].mxu0
  %109 = vdwg.mxu0
  %v110 = vmul.f32 %v105, 0.2
  %v111 = vmax.f32 %v105, %v110
  %v112 = vld [vmem:[%s3] sm:$0xf]
  %v113 = vld [vmem:[%s4] sm:$0xf]
  %v114 = vld [vmem:[%s5] sm:$0x1]
  %v116 = vlaneseq
  %v117 = vshrl.u32 %v116, 7
  %v118 = vsub.s32 0, %v117
  %v119 = vrot.slane %v114, %v118
  %vm121 = vcmask 64512
  %v123 = vsel %vm121, %v112, 0
  %vm125 = vcmask 1043456
  %v127 = vsel %vm125, %v113, 0
  %129 = vmatprep.subr.bf16.mxu0 0
  %130 = vmatpush1.bf16.msra.mxu0 %v127
  %131 = vmatprep.subr.bf16.mxu0 0
  %132 = vmatpush1.bf16.msra.mxu0 0
  %133 = vmatprep.subr.bf16.mxu0 0
  %134 = vmatpush1.bf16.msra.mxu0 0
  %135 = vmatprep.subr.bf16.mxu0 0
  %136 = vmatpush1.bf16.msra.mxu0 0
  %137 = vmatprep.subr.bf16.mxu0 0
  %138 = vmatpush1.bf16.msra.mxu0 0
  %139 = vmatprep.subr.bf16.mxu0 0
  %140 = vmatpush1.bf16.msra.mxu0 0
  %141 = vmatprep.subr.bf16.mxu0 0
  %142 = vmatpush1.bf16.msra.mxu0 0
  %143 = vmatprep.subr.bf16.mxu0 0
  %144 = vmatpush1.bf16.msra.mxu0 0
  %145 = vmatprep.subr.bf16.mxu0 0
  %146 = vmatpush1.bf16.msra.mxu0 0
  %147 = vmatprep.subr.bf16.mxu0 0
  %148 = vmatpush1.bf16.msra.mxu0 0
  %149 = vmatprep.subr.bf16.mxu0 0
  %150 = vmatpush1.bf16.msra.mxu0 0
  %151 = vmatprep.subr.bf16.mxu0 0
  %152 = vmatpush1.bf16.msra.mxu0 0
  %153 = vmatprep.subr.bf16.mxu0 0
  %154 = vmatpush1.bf16.msra.mxu0 0
  %155 = vmatprep.subr.bf16.mxu0 0
  %156 = vmatpush1.bf16.msra.mxu0 0
  %157 = vmatprep.subr.bf16.mxu0 0
  %158 = vmatpush1.bf16.msra.mxu0 0
  %159 = vmatprep.subr.bf16.mxu0 0
  %160 = vmatpush1.bf16.msra.mxu0 0
  %161 = vmatprep.mubr.bf16.mxu0 0
  %162 = vmatmul.mubr.bf16.gmra.mrb[0].mxu0 %v123
  %v163 = vpop.f32.mrb[0].mxu0
  %v164 = vadd.f32 %v119, %v163
  %v165 = vpop.f32.mrb[0].mxu0
  %v166 = vpop.f32.mrb[0].mxu0
  %v167 = vpop.f32.mrb[0].mxu0
  %168 = vdwg.mxu0
  %v169 = vmul.f32 %v164, 0.2
  %v170 = vmax.f32 %v164, %v169
  %v171 = vpack.c.bf16 %v170, %v170
  %v172 = vld [vmem:[%s6] sm:$0xf]
  %v173 = vld [vmem:[%s6 + $0x4] sm:$0xf]
  %v174 = vld [vmem:[%s6 + $0x8] sm:$0xf]
  %v175 = vld [vmem:[%s6 + $0xc] sm:$0xf]
  %v176 = vld [vmem:[%s6 + $0x10] sm:$0xf]
  %v177 = vld [vmem:[%s6 + $0x14] sm:$0xf]
  %v178 = vld [vmem:[%s6 + $0x18] sm:$0xf]
  %v179 = vld [vmem:[%s6 + $0x1c] sm:$0xf]
  %v180 = vld [vmem:[%s6 + $0x20] sm:$0xf]
  %v181 = vld [vmem:[%s6 + $0x24] sm:$0xf]
  %v182 = vld [vmem:[%s6 + $0x28] sm:$0xf]
  %v183 = vld [vmem:[%s6 + $0x2c] sm:$0xf]
  %v184 = vld [vmem:[%s6 + $0x30] sm:$0xf]
  %v185 = vld [vmem:[%s6 + $0x34] sm:$0xf]
  %v186 = vld [vmem:[%s6 + $0x38] sm:$0xf]
  %v187 = vld [vmem:[%s6 + $0x3c] sm:$0xf]
  %v188 = vld [vmem:[%s7] sm:$0x1]
  %v190 = vlaneseq
  %v191 = vshrl.u32 %v190, 7
  %v192 = vsub.s32 0, %v191
  %v193 = vrot.slane %v188, %v192
  %v211 = vunpack.c.l.b16 %v172
  %v212 = vunpack.c.l.b16 %v173
  %v213 = vunpack.c.l.b16 %v174
  %v214 = vunpack.c.l.b16 %v175
  %v215 = vunpack.c.l.b16 %v176
  %v216 = vunpack.c.l.b16 %v177
  %v217 = vunpack.c.l.b16 %v178
  %v218 = vunpack.c.l.b16 %v179
  %v219 = vunpack.c.l.b16 %v180
  %v220 = vunpack.c.l.b16 %v181
  %v221 = vunpack.c.l.b16 %v182
  %v222 = vunpack.c.l.b16 %v183
  %v223 = vunpack.c.l.b16 %v184
  %v224 = vunpack.c.l.b16 %v185
  %v225 = vunpack.c.l.b16 %v186
  %v226 = vunpack.c.l.b16 %v187
  %v227 = vpack.c.b16 %v212, %v211
  %v228 = vpack.c.b16 %v214, %v213
  %v229 = vpack.c.b16 %v216, %v215
  %v230 = vpack.c.b16 %v218, %v217
  %v231 = vpack.c.b16 %v220, %v219
  %v232 = vpack.c.b16 %v222, %v221
  %v233 = vpack.c.b16 %v224, %v223
  %v234 = vpack.c.b16 %v226, %v225
  %243 = vmatprep.subr.bf16.mxu0 0
  %244 = vmatpush1.bf16.msra.mxu0 %v227
  %245 = vmatprep.subr.bf16.mxu0 0
  %246 = vmatpush1.bf16.msra.mxu0 %v228
  %247 = vmatprep.subr.bf16.mxu0 0
  %248 = vmatpush1.bf16.msra.mxu0 %v229
  %249 = vmatprep.subr.bf16.mxu0 0
  %250 = vmatpush1.bf16.msra.mxu0 %v230
  %251 = vmatprep.subr.bf16.mxu0 0
  %252 = vmatpush1.bf16.msra.mxu0 %v231
  %253 = vmatprep.subr.bf16.mxu0 0
  %254 = vmatpush1.bf16.msra.mxu0 %v232
  %255 = vmatprep.subr.bf16.mxu0 0
  %256 = vmatpush1.bf16.msra.mxu0 %v233
  %257 = vmatprep.subr.bf16.mxu0 0
  %258 = vmatpush1.bf16.msra.mxu0 %v234
  %259 = vmatprep.subr.bf16.mxu0 0
  %260 = vmatpush1.bf16.msra.mxu0 0
  %261 = vmatprep.subr.bf16.mxu0 0
  %262 = vmatpush1.bf16.msra.mxu0 0
  %263 = vmatprep.subr.bf16.mxu0 0
  %264 = vmatpush1.bf16.msra.mxu0 0
  %265 = vmatprep.subr.bf16.mxu0 0
  %266 = vmatpush1.bf16.msra.mxu0 0
  %267 = vmatprep.subr.bf16.mxu0 0
  %268 = vmatpush1.bf16.msra.mxu0 0
  %269 = vmatprep.subr.bf16.mxu0 0
  %270 = vmatpush1.bf16.msra.mxu0 0
  %271 = vmatprep.subr.bf16.mxu0 0
  %272 = vmatpush1.bf16.msra.mxu0 0
  %273 = vmatprep.subr.bf16.mxu0 0
  %274 = vmatpush1.bf16.msra.mxu0 0
  %275 = vmatprep.mubr.bf16.mxu0 0
  %276 = vmatmul.mubr.bf16.gmra.mrb[0].mxu0 %v171
  %v277 = vpop.f32.mrb[0].mxu0
  %v278 = vadd.f32 %v193, %v277
  %v279 = vpop.f32.mrb[0].mxu0
  %v280 = vpop.f32.mrb[0].mxu0
  %v281 = vpop.f32.mrb[0].mxu0
  %282 = vdwg.mxu0
  %v283 = vmul.f32 %v278, 0.2
  %v284 = vmax.f32 %v278, %v283
  %v285 = vpack.c.bf16 %v284, %v284
  %v286 = vld [vmem:[%s8] sm:$0xf]
  %v287 = vld [vmem:[%s8 + $0x4] sm:$0xf]
  %v288 = vld [vmem:[%s8 + $0x8] sm:$0xf]
  %v289 = vld [vmem:[%s8 + $0xc] sm:$0xf]
  %v290 = vld [vmem:[%s8 + $0x10] sm:$0xf]
  %v291 = vld [vmem:[%s8 + $0x14] sm:$0xf]
  %v292 = vld [vmem:[%s8 + $0x18] sm:$0xf]
  %v293 = vld [vmem:[%s8 + $0x1c] sm:$0xf]
  %v294 = vld [vmem:[%s8 + $0x20] sm:$0xf]
  %v295 = vld [vmem:[%s8 + $0x24] sm:$0xf]
  %v296 = vld [vmem:[%s8 + $0x28] sm:$0xf]
  %v297 = vld [vmem:[%s8 + $0x2c] sm:$0xf]
  %v298 = vld [vmem:[%s8 + $0x30] sm:$0xf]
  %v299 = vld [vmem:[%s8 + $0x34] sm:$0xf]
  %v300 = vld [vmem:[%s8 + $0x38] sm:$0xf]
  %v301 = vld [vmem:[%s8 + $0x3c] sm:$0xf]
  %v302 = vld [vmem:[%s9] sm:$0x1]
  %v304 = vlaneseq
  %v305 = vshrl.u32 %v304, 7
  %v306 = vsub.s32 0, %v305
  %v307 = vrot.slane %v302, %v306
  %v325 = vunpack.c.l.b16 %v286
  %v326 = vunpack.c.l.b16 %v287
  %v327 = vunpack.c.l.b16 %v288
  %v328 = vunpack.c.l.b16 %v289
  %v329 = vunpack.c.l.b16 %v290
  %v330 = vunpack.c.l.b16 %v291
  %v331 = vunpack.c.l.b16 %v292
  %v332 = vunpack.c.l.b16 %v293
  %v333 = vunpack.c.l.b16 %v294
  %v334 = vunpack.c.l.b16 %v295
  %v335 = vunpack.c.l.b16 %v296
  %v336 = vunpack.c.l.b16 %v297
  %v337 = vunpack.c.l.b16 %v298
  %v338 = vunpack.c.l.b16 %v299
  %v339 = vunpack.c.l.b16 %v300
  %v340 = vunpack.c.l.b16 %v301
  %v341 = vpack.c.b16 %v326, %v325
  %v342 = vpack.c.b16 %v328, %v327
  %v343 = vpack.c.b16 %v330, %v329
  %v344 = vpack.c.b16 %v332, %v331
  %v345 = vpack.c.b16 %v334, %v333
  %v346 = vpack.c.b16 %v336, %v335
  %v347 = vpack.c.b16 %v338, %v337
  %v348 = vpack.c.b16 %v340, %v339
  %357 = vmatprep.subr.bf16.mxu0 0
  %358 = vmatpush1.bf16.msra.mxu0 %v341
  %359 = vmatprep.subr.bf16.mxu0 0
  %360 = vmatpush1.bf16.msra.mxu0 %v342
  %361 = vmatprep.subr.bf16.mxu0 0
  %362 = vmatpush1.bf16.msra.mxu0 %v343
  %363 = vmatprep.subr.bf16.mxu0 0
  %364 = vmatpush1.bf16.msra.mxu0 %v344
  %365 = vmatprep.subr.bf16.mxu0 0
  %366 = vmatpush1.bf16.msra.mxu0 %v345
  %367 = vmatprep.subr.bf16.mxu0 0
  %368 = vmatpush1.bf16.msra.mxu0 %v346
  %369 = vmatprep.subr.bf16.mxu0 0
  %370 = vmatpush1.bf16.msra.mxu0 %v347
  %371 = vmatprep.subr.bf16.mxu0 0
  %372 = vmatpush1.bf16.msra.mxu0 %v348
  %373 = vmatprep.subr.bf16.mxu0 0
  %374 = vmatpush1.bf16.msra.mxu0 0
  %375 = vmatprep.subr.bf16.mxu0 0
  %376 = vmatpush1.bf16.msra.mxu0 0
  %377 = vmatprep.subr.bf16.mxu0 0
  %378 = vmatpush1.bf16.msra.mxu0 0
  %379 = vmatprep.subr.bf16.mxu0 0
  %380 = vmatpush1.bf16.msra.mxu0 0
  %381 = vmatprep.subr.bf16.mxu0 0
  %382 = vmatpush1.bf16.msra.mxu0 0
  %383 = vmatprep.subr.bf16.mxu0 0
  %384 = vmatpush1.bf16.msra.mxu0 0
  %385 = vmatprep.subr.bf16.mxu0 0
  %386 = vmatpush1.bf16.msra.mxu0 0
  %387 = vmatprep.subr.bf16.mxu0 0
  %388 = vmatpush1.bf16.msra.mxu0 0
  %389 = vmatprep.mubr.bf16.mxu0 0
  %390 = vmatmul.mubr.bf16.gmra.mrb[0].mxu0 %v285
  %v391 = vpop.f32.mrb[0].mxu0
  %v392 = vadd.f32 %v307, %v391
  %v393 = vpop.f32.mrb[0].mxu0
  %v394 = vpop.f32.mrb[0].mxu0
  %v395 = vpop.f32.mrb[0].mxu0
  %396 = vdwg.mxu0
  %v397 = vmul.f32 %v392, 0.2
  %v398 = vmax.f32 %v392, %v397
  %v399 = vld [vmem:[%s10] sm:$0x3]
  %v400 = vld [vmem:[%s11] sm:$0xff]
  %v402 = vsel %vm121, %v399, 0
  %404 = vmatprep.subr.mxu0 0.0
  %405 = vmatpush1.msra.mxu0 %v398
  %406 = vmatprep.subr.mxu0 0.0
  %407 = vmatpush1.msra.mxu0 0.0
  %408 = vmatprep.subr.mxu0 0.0
  %409 = vmatpush1.msra.mxu0 0.0
  %410 = vmatprep.subr.mxu0 0.0
  %411 = vmatpush1.msra.mxu0 0.0
  %412 = vmatprep.subr.mxu0 0.0
  %413 = vmatpush1.msra.mxu0 0.0
  %414 = vmatprep.subr.mxu0 0.0
  %415 = vmatpush1.msra.mxu0 0.0
  %416 = vmatprep.subr.mxu0 0.0
  %417 = vmatpush1.msra.mxu0 0.0
  %418 = vmatprep.subr.mxu0 0.0
  %419 = vmatpush1.msra.mxu0 0.0
  %420 = vmatprep.subr.mxu0 0.0
  %421 = vmatpush1.msra.mxu0 0.0
  %422 = vmatprep.subr.mxu0 0.0
  %423 = vmatpush1.msra.mxu0 0.0
  %424 = vmatprep.subr.mxu0 0.0
  %425 = vmatpush1.msra.mxu0 0.0
  %426 = vmatprep.subr.mxu0 0.0
  %427 = vmatpush1.msra.mxu0 0.0
  %428 = vmatprep.subr.mxu0 0.0
  %429 = vmatpush1.msra.mxu0 0.0
  %430 = vmatprep.subr.mxu0 0.0
  %431 = vmatpush1.msra.mxu0 0.0
  %432 = vmatprep.subr.mxu0 0.0
  %433 = vmatpush1.msra.mxu0 0.0
  %434 = vmatprep.subr.mxu0 0.0
  %435 = vmatpush1.msra.mxu0 0.0
  %436 = vmatprep.subr.mxu0 0.0
  %437 = vmatpush1.msra.mxu0 0.0
  %438 = vmatprep.subr.mxu0 0.0
  %439 = vmatpush1.msra.mxu0 0.0
  %440 = vmatprep.subr.mxu0 0.0
  %441 = vmatpush1.msra.mxu0 0.0
  %442 = vmatprep.subr.mxu0 0.0
  %443 = vmatpush1.msra.mxu0 0.0
  %444 = vmatprep.subr.mxu0 0.0
  %445 = vmatpush1.msra.mxu0 0.0
  %446 = vmatprep.subr.mxu0 0.0
  %447 = vmatpush1.msra.mxu0 0.0
  %448 = vmatprep.subr.mxu0 0.0
  %449 = vmatpush1.msra.mxu0 0.0
  %450 = vmatprep.subr.mxu0 0.0
  %451 = vmatpush1.msra.mxu0 0.0
  %452 = vmatprep.subr.mxu0 0.0
  %453 = vmatpush1.msra.mxu0 0.0
  %454 = vmatprep.subr.mxu0 0.0
  %455 = vmatpush1.msra.mxu0 0.0
  %456 = vmatprep.subr.mxu0 0.0
  %457 = vmatpush1.msra.mxu0 0.0
  %458 = vmatprep.subr.mxu0 0.0
  %459 = vmatpush1.msra.mxu0 0.0
  %460 = vmatprep.subr.mxu0 0.0
  %461 = vmatpush1.msra.mxu0 0.0
  %462 = vmatprep.subr.mxu0 0.0
  %463 = vmatpush1.msra.mxu0 0.0
  %464 = vmatprep.subr.mxu0 0.0
  %465 = vmatpush1.msra.mxu0 0.0
  %466 = vmatprep.subr.mxu0 0.0
  %467 = vmatpush1.msra.mxu0 0.0
  %468 = vmatprep.mubr.f32.mxu0 0.0
  %469 = vmatmul.mubr.f32.gmra.mrb[0].mxu0 %v402
  %v470 = vpop.f32.mrb[0].mxu0
  %v471 = vadd.f32 0.0, %v470
  %v472 = vpop.f32.mrb[0].mxu0
  %473 = vdwg.mxu0
  %v474 = vmul.f32 %v471, 0.25
  %vm475 = vcmask 15360
  %v477 = vsel %vm475, %v400, 0
  %vm479 = vcmask 1041408
  %v481 = vsel %vm479, %v474, 0
  %483 = vmatprep.subr.mxu0 0.0
  %484 = vmatpush1.msra.mxu0 %v481
  %485 = vmatprep.subr.mxu0 0.0
  %486 = vmatpush1.msra.mxu0 0.0
  %487 = vmatprep.subr.mxu0 0.0
  %488 = vmatpush1.msra.mxu0 0.0
  %489 = vmatprep.subr.mxu0 0.0
  %490 = vmatpush1.msra.mxu0 0.0
  %491 = vmatprep.subr.mxu0 0.0
  %492 = vmatpush1.msra.mxu0 0.0
  %493 = vmatprep.subr.mxu0 0.0
  %494 = vmatpush1.msra.mxu0 0.0
  %495 = vmatprep.subr.mxu0 0.0
  %496 = vmatpush1.msra.mxu0 0.0
  %497 = vmatprep.subr.mxu0 0.0
  %498 = vmatpush1.msra.mxu0 0.0
  %499 = vmatprep.subr.mxu0 0.0
  %500 = vmatpush1.msra.mxu0 0.0
  %501 = vmatprep.subr.mxu0 0.0
  %502 = vmatpush1.msra.mxu0 0.0
  %503 = vmatprep.subr.mxu0 0.0
  %504 = vmatpush1.msra.mxu0 0.0
  %505 = vmatprep.subr.mxu0 0.0
  %506 = vmatpush1.msra.mxu0 0.0
  %507 = vmatprep.subr.mxu0 0.0
  %508 = vmatpush1.msra.mxu0 0.0
  %509 = vmatprep.subr.mxu0 0.0
  %510 = vmatpush1.msra.mxu0 0.0
  %511 = vmatprep.subr.mxu0 0.0
  %512 = vmatpush1.msra.mxu0 0.0
  %513 = vmatprep.subr.mxu0 0.0
  %514 = vmatpush1.msra.mxu0 0.0
  %515 = vmatprep.subr.mxu0 0.0
  %516 = vmatpush1.msra.mxu0 0.0
  %517 = vmatprep.subr.mxu0 0.0
  %518 = vmatpush1.msra.mxu0 0.0
  %519 = vmatprep.subr.mxu0 0.0
  %520 = vmatpush1.msra.mxu0 0.0
  %521 = vmatprep.subr.mxu0 0.0
  %522 = vmatpush1.msra.mxu0 0.0
  %523 = vmatprep.subr.mxu0 0.0
  %524 = vmatpush1.msra.mxu0 0.0
  %525 = vmatprep.subr.mxu0 0.0
  %526 = vmatpush1.msra.mxu0 0.0
  %527 = vmatprep.subr.mxu0 0.0
  %528 = vmatpush1.msra.mxu0 0.0
  %529 = vmatprep.subr.mxu0 0.0
  %530 = vmatpush1.msra.mxu0 0.0
  %531 = vmatprep.subr.mxu0 0.0
  %532 = vmatpush1.msra.mxu0 0.0
  %533 = vmatprep.subr.mxu0 0.0
  %534 = vmatpush1.msra.mxu0 0.0
  %535 = vmatprep.subr.mxu0 0.0
  %536 = vmatpush1.msra.mxu0 0.0
  %537 = vmatprep.subr.mxu0 0.0
  %538 = vmatpush1.msra.mxu0 0.0
  %539 = vmatprep.subr.mxu0 0.0
  %540 = vmatpush1.msra.mxu0 0.0
  %541 = vmatprep.subr.mxu0 0.0
  %542 = vmatpush1.msra.mxu0 0.0
  %543 = vmatprep.subr.mxu0 0.0
  %544 = vmatpush1.msra.mxu0 0.0
  %545 = vmatprep.subr.mxu0 0.0
  %546 = vmatpush1.msra.mxu0 0.0
  %547 = vmatprep.mubr.f32.mxu0 0.0
  %548 = vmatmul.mubr.f32.gmra.mrb[0].mxu0 %v477
  %v549 = vpop.f32.mrb[0].mxu0
  %v550 = vadd.f32 0.0, %v549
  %v551 = vpop.f32.mrb[0].mxu0
  %552 = vdwg.mxu0
  %v553 = vsub.f32 %v398, %v550
  %v554 = vmul.f32 %v553, %v553
  %555 = vmatprep.subr.mxu0 0.0
  %556 = vmatpush1.msra.mxu0 %v554
  %557 = vmatprep.subr.mxu0 0.0
  %558 = vmatpush1.msra.mxu0 0.0
  %559 = vmatprep.subr.mxu0 0.0
  %560 = vmatpush1.msra.mxu0 0.0
  %561 = vmatprep.subr.mxu0 0.0
  %562 = vmatpush1.msra.mxu0 0.0
  %563 = vmatprep.subr.mxu0 0.0
  %564 = vmatpush1.msra.mxu0 0.0
  %565 = vmatprep.subr.mxu0 0.0
  %566 = vmatpush1.msra.mxu0 0.0
  %567 = vmatprep.subr.mxu0 0.0
  %568 = vmatpush1.msra.mxu0 0.0
  %569 = vmatprep.subr.mxu0 0.0
  %570 = vmatpush1.msra.mxu0 0.0
  %571 = vmatprep.subr.mxu0 0.0
  %572 = vmatpush1.msra.mxu0 0.0
  %573 = vmatprep.subr.mxu0 0.0
  %574 = vmatpush1.msra.mxu0 0.0
  %575 = vmatprep.subr.mxu0 0.0
  %576 = vmatpush1.msra.mxu0 0.0
  %577 = vmatprep.subr.mxu0 0.0
  %578 = vmatpush1.msra.mxu0 0.0
  %579 = vmatprep.subr.mxu0 0.0
  %580 = vmatpush1.msra.mxu0 0.0
  %581 = vmatprep.subr.mxu0 0.0
  %582 = vmatpush1.msra.mxu0 0.0
  %583 = vmatprep.subr.mxu0 0.0
  %584 = vmatpush1.msra.mxu0 0.0
  %585 = vmatprep.subr.mxu0 0.0
  %586 = vmatpush1.msra.mxu0 0.0
  %587 = vmatprep.subr.mxu0 0.0
  %588 = vmatpush1.msra.mxu0 0.0
  %589 = vmatprep.subr.mxu0 0.0
  %590 = vmatpush1.msra.mxu0 0.0
  %591 = vmatprep.subr.mxu0 0.0
  %592 = vmatpush1.msra.mxu0 0.0
  %593 = vmatprep.subr.mxu0 0.0
  %594 = vmatpush1.msra.mxu0 0.0
  %595 = vmatprep.subr.mxu0 0.0
  %596 = vmatpush1.msra.mxu0 0.0
  %597 = vmatprep.subr.mxu0 0.0
  %598 = vmatpush1.msra.mxu0 0.0
  %599 = vmatprep.subr.mxu0 0.0
  %600 = vmatpush1.msra.mxu0 0.0
  %601 = vmatprep.subr.mxu0 0.0
  %602 = vmatpush1.msra.mxu0 0.0
  %603 = vmatprep.subr.mxu0 0.0
  %604 = vmatpush1.msra.mxu0 0.0
  %605 = vmatprep.subr.mxu0 0.0
  %606 = vmatpush1.msra.mxu0 0.0
  %607 = vmatprep.subr.mxu0 0.0
  %608 = vmatpush1.msra.mxu0 0.0
  %609 = vmatprep.subr.mxu0 0.0
  %610 = vmatpush1.msra.mxu0 0.0
  %611 = vmatprep.subr.mxu0 0.0
  %612 = vmatpush1.msra.mxu0 0.0
  %613 = vmatprep.subr.mxu0 0.0
  %614 = vmatpush1.msra.mxu0 0.0
  %615 = vmatprep.subr.mxu0 0.0
  %616 = vmatpush1.msra.mxu0 0.0
  %617 = vmatprep.subr.mxu0 0.0
  %618 = vmatpush1.msra.mxu0 0.0
  %619 = vmatprep.mubr.f32.mxu0 0.0
  %620 = vmatmul.mubr.f32.gmra.mrb[0].mxu0 %v402
  %v621 = vpop.f32.mrb[0].mxu0
  %v622 = vadd.f32 0.0, %v621
  %v623 = vpop.f32.mrb[0].mxu0
  %624 = vdwg.mxu0
  %v625 = vmul.f32 %v622, 0.33333334
  %v626 = vadd.f32 %v111, %v471
  %vm627 = vcmask 58368
  %628 = vst.msk [vmem:[%s12] sm:$0x3] %vm627, %v626
  %629 = vrot.lane.b32.xlu0 %v474, 8
  %v630 = vpop.permute.xlu0 %629
  %v632 = vmul.f32 %v111, %v630
  %634 = vrot.lane.b32.xlu0 %v632, 120
  %v635 = vpop.permute.xlu0 %634
  %v637 = vadd.f32 %v111, %v635
  %s638 = scalar_lea.vmem %s12, 2
  %639 = vst.msk [vmem:[%s638] sm:$0x3] %vm627, %v637
  %v640 = vmul.f32 %v111, %v111
  %642 = vrot.lane.b32.xlu0 %v625, 8
  %v643 = vpop.permute.xlu0 %642
  %v645 = vmul.f32 %v640, %v643
  %647 = vrot.lane.b32.xlu0 %v645, 120
  %v648 = vpop.permute.xlu0 %647
  %s650 = scalar_lea.vmem %s12, 4
  %651 = vst.msk [vmem:[%s650] sm:$0x3] %vm627, %v648
  // Predicated region
  $region50: #{encoder_forward.9} parent=0 // pred_check
    _
  $region51: #{encoder_forward.9} parent=0 // pred_check_branch
    %653 = sbr.rel (0) target = $region53
  $region52: #{encoder_forward.9} parent=0 // pred_region
    _
  $region53: #{encoder_forward.9} parent=0 // pred_fallthru
    _
  // Predicated region
  $region54: #{encoder_forward.9} parent=0 // pred_check
    _
  $region55: #{encoder_forward.9} parent=0 // pred_check_branch
    %655 = sbr.rel (0) target = $region57
  $region56: #{encoder_forward.9} parent=0 // pred_region
    _
  $region57: #{encoder_forward.9} parent=0 // pred_fallthru
    _

</llo_original>
